<compile_context>
chip_gen: v6e
topology: v6e:2x2x1
jax: 0.10.0
libtpu: 0.0.40
codegen_flags: <defaults>
</compile_context>

<pallas_src>
import math
import numpy as np
import jax
import jax.numpy as jnp
from jax.experimental import pallas as pl
from jax.experimental.pallas import tpu as pltpu

# ----------------------------------------------------------------------------
# Hyper-parameters (scaled-down: d_model 320 -> 64, dim_feedforward -> 256)
# ----------------------------------------------------------------------------
D_MODEL = 64
NHEAD = 8
HEAD_DIM = D_MODEL // NHEAD
DIM_FF = 4 * D_MODEL
PE_MAX_LEN = 2048
LN_EPS = 1e-5

_GELU_C = math.sqrt(2.0 / math.pi)


# ----------------------------------------------------------------------------
# In-kernel math helpers (traced inside the Pallas kernel)
# ----------------------------------------------------------------------------
def _gelu_tanh(x):
    # tanh-approximate GELU: runs on the otherwise-idle EUP slot instead of a
    # ~10-op VALU erf polynomial; |err| vs exact erf GELU < 1e-3.
    # TODO(synk): use exact erf if bit-level parity with F.gelu is required.
    return 0.5 * x * (1.0 + jnp.tanh(_GELU_C * (x + 0.044715 * x * x * x)))


def _layernorm(x, g, b):
    mu = jnp.mean(x, axis=-1, keepdims=True)
    xc = x - mu
    var = jnp.mean(xc * xc, axis=-1, keepdims=True)
    return xc * jax.lax.rsqrt(var + LN_EPS) * g + b


# ----------------------------------------------------------------------------
# Fused encoder-layer kernel (one grid step per batch element)
# ----------------------------------------------------------------------------
def _encoder_layer_kernel(x_ref, bqkv_ref, wqkv_ref, wo_ref, bo_ref,
                          g1_ref, b1_ref, g2_ref, b2_ref,
                          w1_ref, c1_ref, w2_ref, c2_ref, o_ref):
    S, D = x_ref.shape
    dh = D // NHEAD

    x = x_ref[...]                                              # (S, D) f32

    # ---------------- self-attention block (norm_first) --------------------
    y = _layernorm(x, g1_ref[...], b1_ref[...])                 # LN1
    # fused Q|K|V projection; bqkv already carries biases + PE@Wq/Wk and the
    # 1/sqrt(dh) q-scale (also folded into the Wq columns of wqkv).
    qkv = jnp.dot(y.astype(jnp.bfloat16), wqkv_ref[...],
                  preferred_element_type=jnp.float32) + bqkv_ref[...]

    heads = []
    for h in range(NHEAD):                                      # fully unrolled
        q = qkv[:, h * dh:(h + 1) * dh]                         # static lane
        k = qkv[:, D + h * dh:D + (h + 1) * dh]                 # slices: no
        v = qkv[:, 2 * D + h * dh:2 * D + (h + 1) * dh]         # relayouts
        s = jax.lax.dot_general(q.astype(jnp.bfloat16), k.astype(jnp.bfloat16),
                                (((1,), (1,)), ((), ())),
                                preferred_element_type=jnp.float32)   # (S, S)
        s = s - jnp.max(s, axis=-1, keepdims=True)
        e = jnp.exp(s)
        p = e * pl.reciprocal(jnp.sum(e, axis=-1, keepdims=True), approx=True)
        heads.append(jnp.dot(p.astype(jnp.bfloat16), v.astype(jnp.bfloat16),
                             preferred_element_type=jnp.float32))     # (S, dh)

    # concat(head outputs) -> ONE full-depth output projection (K = D)
    cat = jnp.concatenate(heads, axis=-1)                       # (S, D)
    attn = jnp.dot(cat.astype(jnp.bfloat16), wo_ref[...],
                   preferred_element_type=jnp.float32) + bo_ref[...]
    x1 = x + attn                                               # dropout1 = id

    # --------------------------- feed-forward block ------------------------
    z = _layernorm(x1, g2_ref[...], b2_ref[...])                # LN2
    h1 = jnp.dot(z.astype(jnp.bfloat16), w1_ref[...],
                 preferred_element_type=jnp.float32) + c1_ref[...]
    h1 = _gelu_tanh(h1)
    ff = jnp.dot(h1.astype(jnp.bfloat16), w2_ref[...],
                 preferred_element_type=jnp.float32) + c2_ref[...]
    o_ref[...] = x1 + ff                                        # dropout2 = id


def encoder_layer_fwd(x, p):
    """x: (B, S, D) float32 (batch_first).  Returns (B, S, D) float32."""
    B, S, D = x.shape
    FF = p['w1_bf'].shape[1]
    scale = 1.0 / math.sqrt(D // NHEAD)

    # PE folded into the projection as a (S, 3D) additive bias (q/k get PE,
    # v does not; q is pre-scaled by 1/sqrt(head_dim)).  Tiny XLA glue,
    # computed once per call outside the kernel.
    pe_s = p['pe'][:S]
    bias_q = (pe_s @ p['wq'] + p['bq']) * scale
    bias_k = pe_s @ p['wk'] + p['bk']
    bias_v = jnp.broadcast_to(p['bv'], (S, D))
    bqkv = jnp.concatenate([bias_q, bias_k, bias_v], axis=-1)    # (S, 3D) f32

    def bspec(shape):
        return pl.BlockSpec(shape, lambda b: (0,) * len(shape))

    row = pl.BlockSpec((None, S, D), lambda b: (b, 0, 0))
    return pl.pallas_call(
        _encoder_layer_kernel,
        grid=(B,),
        in_specs=[row,
                  bspec((S, 3 * D)), bspec((D, 3 * D)),
                  bspec((D, D)), bspec((1, D)),
                  bspec((1, D)), bspec((1, D)), bspec((1, D)), bspec((1, D)),
                  bspec((D, FF)), bspec((1, FF)),
                  bspec((FF, D)), bspec((1, D))],
        out_specs=pl.BlockSpec((None, S, D), lambda b: (b, 0, 0)),
        out_shape=jax.ShapeDtypeStruct((B, S, D), jnp.float32),
        compiler_params=pltpu.CompilerParams(
            dimension_semantics=("parallel",),
            vmem_limit_bytes=32 * 1024 * 1024),
    )(x, bqkv, p['wqkv_bf'],
      p['wo_bf'], p['bo'].reshape(1, D),
      p['g1'].reshape(1, D), p['b1'].reshape(1, D),
      p['g2'].reshape(1, D), p['b2'].reshape(1, D),
      p['w1_bf'], p['c1'].reshape(1, FF),
      p['w2_bf'], p['c2'].reshape(1, D))


# ----------------------------------------------------------------------------
# Parameters & positional encoding
# ----------------------------------------------------------------------------
def positional_encoding(max_len, d_model):
    position = np.arange(max_len, dtype=np.float32)[:, None]
    div_term = np.exp(np.arange(0, d_model, 2, dtype=np.float32)
                      * (-math.log(10000.0) / d_model))
    pe = np.zeros((max_len, d_model), dtype=np.float32)
    pe[:, 0::2] = np.sin(position * div_term)
    pe[:, 1::2] = np.cos(position * div_term)
    return jnp.asarray(pe)


def make_params(key):
    d, ff = D_MODEL, DIM_FF
    ks = jax.random.split(key, 8)

    def lin(k, fin, fout):
        kw, kb = jax.random.split(k)
        w = jax.random.normal(kw, (fin, fout), jnp.float32) / np.sqrt(fin)
        b = 0.02 * jax.random.normal(kb, (fout,), jnp.float32)
        return w, b

    def ln(k, c):
        kg, kb = jax.random.split(k)
        g = 1.0 + 0.05 * jax.random.normal(kg, (c,), jnp.float32)
        b = 0.05 * jax.random.normal(kb, (c,), jnp.float32)
        return g, b

    wq, bq = lin(ks[0], d, d)
    wk, bk = lin(ks[1], d, d)
    wv, bv = lin(ks[2], d, d)
    wo, bo = lin(ks[3], d, d)
    w1, c1 = lin(ks[4], d, ff)
    w2, c2 = lin(ks[5], ff, d)
    g1, b1 = ln(ks[6], d)
    g2, b2 = ln(ks[7], d)

    p = dict(wq=wq, bq=bq, wk=wk, bk=bk, wv=wv, bv=bv, wo=wo, bo=bo,
             w1=w1, c1=c1, w2=w2, c2=c2, g1=g1, b1=b1, g2=g2, b2=b2,
             pe=positional_encoding(PE_MAX_LEN, d))

    # Kernel-side fused / pre-cast weights (scale folded into Wq at build time;
    # bf16 MXU operands with f32 accumulation).
    scale = 1.0 / math.sqrt(HEAD_DIM)
    p['wqkv_bf'] = jnp.concatenate([wq * scale, wk, wv],
                                   axis=1).astype(jnp.bfloat16)   # (D, 3D)
    p['wo_bf'] = wo.astype(jnp.bfloat16)
    p['w1_bf'] = w1.astype(jnp.bfloat16)
    p['w2_bf'] = w2.astype(jnp.bfloat16)
    return p


# ----------------------------------------------------------------------------
# Pure-JAX f32 reference (PyTorch semantics: exact-erf GELU, explicit PE add)
# ----------------------------------------------------------------------------
def encoder_layer_ref(x, p):
    B, S, D = x.shape
    dh = D // NHEAD
    scale = 1.0 / math.sqrt(dh)
    pe_s = p['pe'][:S][None]

    def ln(v, g, b):
        mu = v.mean(-1, keepdims=True)
        var = ((v - mu) ** 2).mean(-1, keepdims=True)
        return (v - mu) / jnp.sqrt(var + LN_EPS) * g + b

    y = ln(x, p['g1'], p['b1'])
    qk_in = y + pe_s
    q = (qk_in @ p['wq'] + p['bq']) * scale
    k = qk_in @ p['wk'] + p['bk']
    v = y @ p['wv'] + p['bv']
    q = q.reshape(B, S, NHEAD, dh).transpose(0, 2, 1, 3)
    k = k.reshape(B, S, NHEAD, dh).transpose(0, 2, 1, 3)
    v = v.reshape(B, S, NHEAD, dh).transpose(0, 2, 1, 3)
    a = jax.nn.softmax(q @ jnp.swapaxes(k, -1, -2), axis=-1)
    o = (a @ v).transpose(0, 2, 1, 3).reshape(B, S, D)
    x1 = x + (o @ p['wo'] + p['bo'])
    z = ln(x1, p['g2'], p['b2'])
    h1 = jax.nn.gelu(z @ p['w1'] + p['c1'], approximate=False)
    return x1 + (h1 @ p['w2'] + p['c2'])


# ----------------------------------------------------------------------------
# Main
# ----------------------------------------------------------------------------
if __name__ == "__main__":
    B, S = 2, 16
    key = jax.random.PRNGKey(0)
    kx, kp = jax.random.split(key)
    src = jax.random.normal(kx, (B, S, D_MODEL), jnp.float32)
    params = make_params(kp)

    fwd = jax.jit(encoder_layer_fwd)
    out = fwd(src, params)
    jax.block_until_ready(out)

    assert out.shape == (B, S, D_MODEL), out.shape
    assert out.dtype == jnp.float32
    assert bool(jnp.all(jnp.isfinite(out)))

    # Correctness smoke-test against the f32 reference.  Loose tolerance
    # covers bf16 MXU operands, tanh-GELU, and the approximate reciprocal.
    ref = jax.jit(encoder_layer_ref)(src, params)
    jax.block_until_ready(ref)
    max_err = float(jnp.max(jnp.abs(out - ref)))
    assert max_err < 1e-1, f"max abs err vs f32 reference: {max_err}"

    print("KERNEL_OK")
</pallas_src>

<mosaic_0001>
module attributes {stable_mosaic.version = 11 : i64} {
  func.func @_encoder_layer_kernel(%arg0: i32, %arg1: memref<1x16x64xf32, #tpu.memory_space<vmem>>, %arg2: memref<16x192xf32, #tpu.memory_space<vmem>>, %arg3: memref<64x192xbf16, #tpu.memory_space<vmem>>, %arg4: memref<64x64xbf16, #tpu.memory_space<vmem>>, %arg5: memref<1x64xf32, #tpu.memory_space<vmem>>, %arg6: memref<1x64xf32, #tpu.memory_space<vmem>>, %arg7: memref<1x64xf32, #tpu.memory_space<vmem>>, %arg8: memref<1x64xf32, #tpu.memory_space<vmem>>, %arg9: memref<1x64xf32, #tpu.memory_space<vmem>>, %arg10: memref<64x256xbf16, #tpu.memory_space<vmem>>, %arg11: memref<1x256xf32, #tpu.memory_space<vmem>>, %arg12: memref<256x64xbf16, #tpu.memory_space<vmem>>, %arg13: memref<1x64xf32, #tpu.memory_space<vmem>>, %arg14: memref<1x16x64xf32, #tpu.memory_space<vmem>>) attributes {dimension_semantics = [#tpu.dimension_semantics<parallel>], iteration_bounds = array<i64: 2>, scalar_prefetch = 0 : i64, scratch_operands = 0 : i64, tpu.core_type = #tpu.core_type<tc>, window_params = [{transform_indices = @transform_0, window_bounds = array<i64: 1, 16, 64>}, {pipeline_mode = #tpu.pipeline_mode<synchronous>, transform_indices = @transform_1, window_bounds = array<i64: 16, 192>}, {pipeline_mode = #tpu.pipeline_mode<synchronous>, transform_indices = @transform_2, window_bounds = array<i64: 64, 192>}, {pipeline_mode = #tpu.pipeline_mode<synchronous>, transform_indices = @transform_3, window_bounds = array<i64: 64, 64>}, {pipeline_mode = #tpu.pipeline_mode<synchronous>, transform_indices = @transform_4, window_bounds = array<i64: 1, 64>}, {pipeline_mode = #tpu.pipeline_mode<synchronous>, transform_indices = @transform_5, window_bounds = array<i64: 1, 64>}, {pipeline_mode = #tpu.pipeline_mode<synchronous>, transform_indices = @transform_6, window_bounds = array<i64: 1, 64>}, {pipeline_mode = #tpu.pipeline_mode<synchronous>, transform_indices = @transform_7, window_bounds = array<i64: 1, 64>}, {pipeline_mode = #tpu.pipeline_mode<synchronous>, transform_indices = @transform_8, window_bounds = array<i64: 1, 64>}, {pipeline_mode = #tpu.pipeline_mode<synchronous>, transform_indices = @transform_9, window_bounds = array<i64: 64, 256>}, {pipeline_mode = #tpu.pipeline_mode<synchronous>, transform_indices = @transform_10, window_bounds = array<i64: 1, 256>}, {pipeline_mode = #tpu.pipeline_mode<synchronous>, transform_indices = @transform_11, window_bounds = array<i64: 256, 64>}, {pipeline_mode = #tpu.pipeline_mode<synchronous>, transform_indices = @transform_12, window_bounds = array<i64: 1, 64>}, {transform_indices = @transform_13, window_bounds = array<i64: 1, 16, 64>}]} {
    %c0 = arith.constant 0 : index
    %c0_0 = arith.constant 0 : index
    %c0_1 = arith.constant 0 : index
    %0 = vector.load %arg1[%c0, %c0_0, %c0_1] : memref<1x16x64xf32, #tpu.memory_space<vmem>>, vector<1x16x64xf32>
    %1 = vector.shape_cast %0 : vector<1x16x64xf32> to vector<16x64xf32>
    %c0_2 = arith.constant 0 : index
    %c0_3 = arith.constant 0 : index
    %2 = vector.load %arg6[%c0_2, %c0_3] : memref<1x64xf32, #tpu.memory_space<vmem>>, vector<1x64xf32>
    %c0_4 = arith.constant 0 : index
    %c0_5 = arith.constant 0 : index
    %3 = vector.load %arg7[%c0_4, %c0_5] : memref<1x64xf32, #tpu.memory_space<vmem>>, vector<1x64xf32>
    %cst = arith.constant dense<0.000000e+00> : vector<16xf32>
    %4 = vector.multi_reduction <add>, %1, %cst [1] : vector<16x64xf32> to vector<16xf32>
    %5 = vector.shape_cast %4 : vector<16xf32> to vector<16x1xf32>
    %cst_6 = arith.constant 6.400000e+01 : f32
    %6 = vector.broadcast %cst_6 : f32 to vector<16x1xf32>
    %7 = arith.divf %5, %6 : vector<16x1xf32>
    %8 = vector.broadcast %7 : vector<16x1xf32> to vector<16x64xf32>
    %9 = arith.subf %1, %8 : vector<16x64xf32>
    %10 = arith.mulf %9, %9 : vector<16x64xf32>
    %cst_7 = arith.constant dense<0.000000e+00> : vector<16xf32>
    %11 = vector.multi_reduction <add>, %10, %cst_7 [1] : vector<16x64xf32> to vector<16xf32>
    %12 = vector.shape_cast %11 : vector<16xf32> to vector<16x1xf32>
    %cst_8 = arith.constant 6.400000e+01 : f32
    %13 = vector.broadcast %cst_8 : f32 to vector<16x1xf32>
    %14 = arith.divf %12, %13 : vector<16x1xf32>
    %cst_9 = arith.constant 9.99999974E-6 : f32
    %15 = vector.broadcast %cst_9 : f32 to vector<16x1xf32>
    %16 = arith.addf %14, %15 : vector<16x1xf32>
    %17 = math.rsqrt %16 : vector<16x1xf32>
    %18 = vector.broadcast %17 : vector<16x1xf32> to vector<16x64xf32>
    %19 = arith.mulf %9, %18 : vector<16x64xf32>
    %20 = vector.broadcast %2 : vector<1x64xf32> to vector<16x64xf32>
    %21 = arith.mulf %19, %20 : vector<16x64xf32>
    %22 = vector.broadcast %3 : vector<1x64xf32> to vector<16x64xf32>
    %23 = arith.addf %21, %22 : vector<16x64xf32>
    %24 = arith.truncf %23 : vector<16x64xf32> to vector<16x64xbf16>
    %c0_10 = arith.constant 0 : index
    %c0_11 = arith.constant 0 : index
    %25 = vector.load %arg3[%c0_10, %c0_11] : memref<64x192xbf16, #tpu.memory_space<vmem>>, vector<64x192xbf16>
    %cst_12 = arith.constant dense<0.000000e+00> : vector<16x192xf32>
    %26 = tpu.matmul %24, %25, %cst_12 {dimension_numbers = #tpu.dot_dimension_numbers<[1], [0], [0], [1], [0, 0, 1, 1], [], []>} : vector<16x64xbf16>, vector<64x192xbf16>, vector<16x192xf32> -> vector<16x192xf32>
    %c0_13 = arith.constant 0 : index
    %c0_14 = arith.constant 0 : index
    %27 = vector.load %arg2[%c0_13, %c0_14] : memref<16x192xf32, #tpu.memory_space<vmem>>, vector<16x192xf32>
    %28 = arith.addf %26, %27 : vector<16x192xf32>
    %29 = vector.extract_strided_slice %28 {offsets = [0, 0], sizes = [16, 8], strides = [1, 1]} : vector<16x192xf32> to vector<16x8xf32>
    %30 = vector.extract_strided_slice %28 {offsets = [0, 64], sizes = [16, 8], strides = [1, 1]} : vector<16x192xf32> to vector<16x8xf32>
    %31 = vector.extract_strided_slice %28 {offsets = [0, 128], sizes = [16, 8], strides = [1, 1]} : vector<16x192xf32> to vector<16x8xf32>
    %32 = arith.truncf %29 : vector<16x8xf32> to vector<16x8xbf16>
    %33 = arith.truncf %30 : vector<16x8xf32> to vector<16x8xbf16>
    %cst_15 = arith.constant dense<0.000000e+00> : vector<16x16xf32>
    %34 = tpu.matmul %32, %33, %cst_15 {dimension_numbers = #tpu.dot_dimension_numbers<[1], [1], [0], [0], [0, 0, 1, 0], [], []>} : vector<16x8xbf16>, vector<16x8xbf16>, vector<16x16xf32> -> vector<16x16xf32>
    %cst_16 = arith.constant dense<0xFF800000> : vector<16xf32>
    %35 = vector.multi_reduction <maximumf>, %34, %cst_16 [1] : vector<16x16xf32> to vector<16xf32>
    %36 = vector.shape_cast %35 : vector<16xf32> to vector<16x1xf32>
    %37 = vector.broadcast %36 : vector<16x1xf32> to vector<16x16xf32>
    %38 = arith.subf %34, %37 : vector<16x16xf32>
    %39 = math.exp %38 : vector<16x16xf32>
    %cst_17 = arith.constant dense<0.000000e+00> : vector<16xf32>
    %40 = vector.multi_reduction <add>, %39, %cst_17 [1] : vector<16x16xf32> to vector<16xf32>
    %41 = vector.shape_cast %40 : vector<16xf32> to vector<16x1xf32>
    %42 = tpu.reciprocal %41 {approx = true} : vector<16x1xf32> -> vector<16x1xf32>
    %43 = vector.broadcast %42 : vector<16x1xf32> to vector<16x16xf32>
    %44 = arith.mulf %39, %43 : vector<16x16xf32>
    %45 = arith.truncf %44 : vector<16x16xf32> to vector<16x16xbf16>
    %46 = arith.truncf %31 : vector<16x8xf32> to vector<16x8xbf16>
    %cst_18 = arith.constant dense<0.000000e+00> : vector<16x8xf32>
    %47 = tpu.matmul %45, %46, %cst_18 {dimension_numbers = #tpu.dot_dimension_numbers<[1], [0], [0], [1], [0, 0, 1, 1], [], []>} : vector<16x16xbf16>, vector<16x8xbf16>, vector<16x8xf32> -> vector<16x8xf32>
    %48 = vector.extract_strided_slice %28 {offsets = [0, 8], sizes = [16, 8], strides = [1, 1]} : vector<16x192xf32> to vector<16x8xf32>
    %49 = vector.extract_strided_slice %28 {offsets = [0, 72], sizes = [16, 8], strides = [1, 1]} : vector<16x192xf32> to vector<16x8xf32>
    %50 = vector.extract_strided_slice %28 {offsets = [0, 136], sizes = [16, 8], strides = [1, 1]} : vector<16x192xf32> to vector<16x8xf32>
    %51 = arith.truncf %48 : vector<16x8xf32> to vector<16x8xbf16>
    %52 = arith.truncf %49 : vector<16x8xf32> to vector<16x8xbf16>
    %cst_19 = arith.constant dense<0.000000e+00> : vector<16x16xf32>
    %53 = tpu.matmul %51, %52, %cst_19 {dimension_numbers = #tpu.dot_dimension_numbers<[1], [1], [0], [0], [0, 0, 1, 0], [], []>} : vector<16x8xbf16>, vector<16x8xbf16>, vector<16x16xf32> -> vector<16x16xf32>
    %cst_20 = arith.constant dense<0xFF800000> : vector<16xf32>
    %54 = vector.multi_reduction <maximumf>, %53, %cst_20 [1] : vector<16x16xf32> to vector<16xf32>
    %55 = vector.shape_cast %54 : vector<16xf32> to vector<16x1xf32>
    %56 = vector.broadcast %55 : vector<16x1xf32> to vector<16x16xf32>
    %57 = arith.subf %53, %56 : vector<16x16xf32>
    %58 = math.exp %57 : vector<16x16xf32>
    %cst_21 = arith.constant dense<0.000000e+00> : vector<16xf32>
    %59 = vector.multi_reduction <add>, %58, %cst_21 [1] : vector<16x16xf32> to vector<16xf32>
    %60 = vector.shape_cast %59 : vector<16xf32> to vector<16x1xf32>
    %61 = tpu.reciprocal %60 {approx = true} : vector<16x1xf32> -> vector<16x1xf32>
    %62 = vector.broadcast %61 : vector<16x1xf32> to vector<16x16xf32>
    %63 = arith.mulf %58, %62 : vector<16x16xf32>
    %64 = arith.truncf %63 : vector<16x16xf32> to vector<16x16xbf16>
    %65 = arith.truncf %50 : vector<16x8xf32> to vector<16x8xbf16>
    %cst_22 = arith.constant dense<0.000000e+00> : vector<16x8xf32>
    %66 = tpu.matmul %64, %65, %cst_22 {dimension_numbers = #tpu.dot_dimension_numbers<[1], [0], [0], [1], [0, 0, 1, 1], [], []>} : vector<16x16xbf16>, vector<16x8xbf16>, vector<16x8xf32> -> vector<16x8xf32>
    %67 = vector.extract_strided_slice %28 {offsets = [0, 16], sizes = [16, 8], strides = [1, 1]} : vector<16x192xf32> to vector<16x8xf32>
    %68 = vector.extract_strided_slice %28 {offsets = [0, 80], sizes = [16, 8], strides = [1, 1]} : vector<16x192xf32> to vector<16x8xf32>
    %69 = vector.extract_strided_slice %28 {offsets = [0, 144], sizes = [16, 8], strides = [1, 1]} : vector<16x192xf32> to vector<16x8xf32>
    %70 = arith.truncf %67 : vector<16x8xf32> to vector<16x8xbf16>
    %71 = arith.truncf %68 : vector<16x8xf32> to vector<16x8xbf16>
    %cst_23 = arith.constant dense<0.000000e+00> : vector<16x16xf32>
    %72 = tpu.matmul %70, %71, %cst_23 {dimension_numbers = #tpu.dot_dimension_numbers<[1], [1], [0], [0], [0, 0, 1, 0], [], []>} : vector<16x8xbf16>, vector<16x8xbf16>, vector<16x16xf32> -> vector<16x16xf32>
    %cst_24 = arith.constant dense<0xFF800000> : vector<16xf32>
    %73 = vector.multi_reduction <maximumf>, %72, %cst_24 [1] : vector<16x16xf32> to vector<16xf32>
    %74 = vector.shape_cast %73 : vector<16xf32> to vector<16x1xf32>
    %75 = vector.broadcast %74 : vector<16x1xf32> to vector<16x16xf32>
    %76 = arith.subf %72, %75 : vector<16x16xf32>
    %77 = math.exp %76 : vector<16x16xf32>
    %cst_25 = arith.constant dense<0.000000e+00> : vector<16xf32>
    %78 = vector.multi_reduction <add>, %77, %cst_25 [1] : vector<16x16xf32> to vector<16xf32>
    %79 = vector.shape_cast %78 : vector<16xf32> to vector<16x1xf32>
    %80 = tpu.reciprocal %79 {approx = true} : vector<16x1xf32> -> vector<16x1xf32>
    %81 = vector.broadcast %80 : vector<16x1xf32> to vector<16x16xf32>
    %82 = arith.mulf %77, %81 : vector<16x16xf32>
    %83 = arith.truncf %82 : vector<16x16xf32> to vector<16x16xbf16>
    %84 = arith.truncf %69 : vector<16x8xf32> to vector<16x8xbf16>
    %cst_26 = arith.constant dense<0.000000e+00> : vector<16x8xf32>
    %85 = tpu.matmul %83, %84, %cst_26 {dimension_numbers = #tpu.dot_dimension_numbers<[1], [0], [0], [1], [0, 0, 1, 1], [], []>} : vector<16x16xbf16>, vector<16x8xbf16>, vector<16x8xf32> -> vector<16x8xf32>
    %86 = vector.extract_strided_slice %28 {offsets = [0, 24], sizes = [16, 8], strides = [1, 1]} : vector<16x192xf32> to vector<16x8xf32>
    %87 = vector.extract_strided_slice %28 {offsets = [0, 88], sizes = [16, 8], strides = [1, 1]} : vector<16x192xf32> to vector<16x8xf32>
    %88 = vector.extract_strided_slice %28 {offsets = [0, 152], sizes = [16, 8], strides = [1, 1]} : vector<16x192xf32> to vector<16x8xf32>
    %89 = arith.truncf %86 : vector<16x8xf32> to vector<16x8xbf16>
    %90 = arith.truncf %87 : vector<16x8xf32> to vector<16x8xbf16>
    %cst_27 = arith.constant dense<0.000000e+00> : vector<16x16xf32>
    %91 = tpu.matmul %89, %90, %cst_27 {dimension_numbers = #tpu.dot_dimension_numbers<[1], [1], [0], [0], [0, 0, 1, 0], [], []>} : vector<16x8xbf16>, vector<16x8xbf16>, vector<16x16xf32> -> vector<16x16xf32>
    %cst_28 = arith.constant dense<0xFF800000> : vector<16xf32>
    %92 = vector.multi_reduction <maximumf>, %91, %cst_28 [1] : vector<16x16xf32> to vector<16xf32>
    %93 = vector.shape_cast %92 : vector<16xf32> to vector<16x1xf32>
    %94 = vector.broadcast %93 : vector<16x1xf32> to vector<16x16xf32>
    %95 = arith.subf %91, %94 : vector<16x16xf32>
    %96 = math.exp %95 : vector<16x16xf32>
    %cst_29 = arith.constant dense<0.000000e+00> : vector<16xf32>
    %97 = vector.multi_reduction <add>, %96, %cst_29 [1] : vector<16x16xf32> to vector<16xf32>
    %98 = vector.shape_cast %97 : vector<16xf32> to vector<16x1xf32>
    %99 = tpu.reciprocal %98 {approx = true} : vector<16x1xf32> -> vector<16x1xf32>
    %100 = vector.broadcast %99 : vector<16x1xf32> to vector<16x16xf32>
    %101 = arith.mulf %96, %100 : vector<16x16xf32>
    %102 = arith.truncf %101 : vector<16x16xf32> to vector<16x16xbf16>
    %103 = arith.truncf %88 : vector<16x8xf32> to vector<16x8xbf16>
    %cst_30 = arith.constant dense<0.000000e+00> : vector<16x8xf32>
    %104 = tpu.matmul %102, %103, %cst_30 {dimension_numbers = #tpu.dot_dimension_numbers<[1], [0], [0], [1], [0, 0, 1, 1], [], []>} : vector<16x16xbf16>, vector<16x8xbf16>, vector<16x8xf32> -> vector<16x8xf32>
    %105 = vector.extract_strided_slice %28 {offsets = [0, 32], sizes = [16, 8], strides = [1, 1]} : vector<16x192xf32> to vector<16x8xf32>
    %106 = vector.extract_strided_slice %28 {offsets = [0, 96], sizes = [16, 8], strides = [1, 1]} : vector<16x192xf32> to vector<16x8xf32>
    %107 = vector.extract_strided_slice %28 {offsets = [0, 160], sizes = [16, 8], strides = [1, 1]} : vector<16x192xf32> to vector<16x8xf32>
    %108 = arith.truncf %105 : vector<16x8xf32> to vector<16x8xbf16>
    %109 = arith.truncf %106 : vector<16x8xf32> to vector<16x8xbf16>
    %cst_31 = arith.constant dense<0.000000e+00> : vector<16x16xf32>
    %110 = tpu.matmul %108, %109, %cst_31 {dimension_numbers = #tpu.dot_dimension_numbers<[1], [1], [0], [0], [0, 0, 1, 0], [], []>} : vector<16x8xbf16>, vector<16x8xbf16>, vector<16x16xf32> -> vector<16x16xf32>
    %cst_32 = arith.constant dense<0xFF800000> : vector<16xf32>
    %111 = vector.multi_reduction <maximumf>, %110, %cst_32 [1] : vector<16x16xf32> to vector<16xf32>
    %112 = vector.shape_cast %111 : vector<16xf32> to vector<16x1xf32>
    %113 = vector.broadcast %112 : vector<16x1xf32> to vector<16x16xf32>
    %114 = arith.subf %110, %113 : vector<16x16xf32>
    %115 = math.exp %114 : vector<16x16xf32>
    %cst_33 = arith.constant dense<0.000000e+00> : vector<16xf32>
    %116 = vector.multi_reduction <add>, %115, %cst_33 [1] : vector<16x16xf32> to vector<16xf32>
    %117 = vector.shape_cast %116 : vector<16xf32> to vector<16x1xf32>
    %118 = tpu.reciprocal %117 {approx = true} : vector<16x1xf32> -> vector<16x1xf32>
    %119 = vector.broadcast %118 : vector<16x1xf32> to vector<16x16xf32>
    %120 = arith.mulf %115, %119 : vector<16x16xf32>
    %121 = arith.truncf %120 : vector<16x16xf32> to vector<16x16xbf16>
    %122 = arith.truncf %107 : vector<16x8xf32> to vector<16x8xbf16>
    %cst_34 = arith.constant dense<0.000000e+00> : vector<16x8xf32>
    %123 = tpu.matmul %121, %122, %cst_34 {dimension_numbers = #tpu.dot_dimension_numbers<[1], [0], [0], [1], [0, 0, 1, 1], [], []>} : vector<16x16xbf16>, vector<16x8xbf16>, vector<16x8xf32> -> vector<16x8xf32>
    %124 = vector.extract_strided_slice %28 {offsets = [0, 40], sizes = [16, 8], strides = [1, 1]} : vector<16x192xf32> to vector<16x8xf32>
    %125 = vector.extract_strided_slice %28 {offsets = [0, 104], sizes = [16, 8], strides = [1, 1]} : vector<16x192xf32> to vector<16x8xf32>
    %126 = vector.extract_strided_slice %28 {offsets = [0, 168], sizes = [16, 8], strides = [1, 1]} : vector<16x192xf32> to vector<16x8xf32>
    %127 = arith.truncf %124 : vector<16x8xf32> to vector<16x8xbf16>
    %128 = arith.truncf %125 : vector<16x8xf32> to vector<16x8xbf16>
    %cst_35 = arith.constant dense<0.000000e+00> : vector<16x16xf32>
    %129 = tpu.matmul %127, %128, %cst_35 {dimension_numbers = #tpu.dot_dimension_numbers<[1], [1], [0], [0], [0, 0, 1, 0], [], []>} : vector<16x8xbf16>, vector<16x8xbf16>, vector<16x16xf32> -> vector<16x16xf32>
    %cst_36 = arith.constant dense<0xFF800000> : vector<16xf32>
    %130 = vector.multi_reduction <maximumf>, %129, %cst_36 [1] : vector<16x16xf32> to vector<16xf32>
    %131 = vector.shape_cast %130 : vector<16xf32> to vector<16x1xf32>
    %132 = vector.broadcast %131 : vector<16x1xf32> to vector<16x16xf32>
    %133 = arith.subf %129, %132 : vector<16x16xf32>
    %134 = math.exp %133 : vector<16x16xf32>
    %cst_37 = arith.constant dense<0.000000e+00> : vector<16xf32>
    %135 = vector.multi_reduction <add>, %134, %cst_37 [1] : vector<16x16xf32> to vector<16xf32>
    %136 = vector.shape_cast %135 : vector<16xf32> to vector<16x1xf32>
    %137 = tpu.reciprocal %136 {approx = true} : vector<16x1xf32> -> vector<16x1xf32>
    %138 = vector.broadcast %137 : vector<16x1xf32> to vector<16x16xf32>
    %139 = arith.mulf %134, %138 : vector<16x16xf32>
    %140 = arith.truncf %139 : vector<16x16xf32> to vector<16x16xbf16>
    %141 = arith.truncf %126 : vector<16x8xf32> to vector<16x8xbf16>
    %cst_38 = arith.constant dense<0.000000e+00> : vector<16x8xf32>
    %142 = tpu.matmul %140, %141, %cst_38 {dimension_numbers = #tpu.dot_dimension_numbers<[1], [0], [0], [1], [0, 0, 1, 1], [], []>} : vector<16x16xbf16>, vector<16x8xbf16>, vector<16x8xf32> -> vector<16x8xf32>
    %143 = vector.extract_strided_slice %28 {offsets = [0, 48], sizes = [16, 8], strides = [1, 1]} : vector<16x192xf32> to vector<16x8xf32>
    %144 = vector.extract_strided_slice %28 {offsets = [0, 112], sizes = [16, 8], strides = [1, 1]} : vector<16x192xf32> to vector<16x8xf32>
    %145 = vector.extract_strided_slice %28 {offsets = [0, 176], sizes = [16, 8], strides = [1, 1]} : vector<16x192xf32> to vector<16x8xf32>
    %146 = arith.truncf %143 : vector<16x8xf32> to vector<16x8xbf16>
    %147 = arith.truncf %144 : vector<16x8xf32> to vector<16x8xbf16>
    %cst_39 = arith.constant dense<0.000000e+00> : vector<16x16xf32>
    %148 = tpu.matmul %146, %147, %cst_39 {dimension_numbers = #tpu.dot_dimension_numbers<[1], [1], [0], [0], [0, 0, 1, 0], [], []>} : vector<16x8xbf16>, vector<16x8xbf16>, vector<16x16xf32> -> vector<16x16xf32>
    %cst_40 = arith.constant dense<0xFF800000> : vector<16xf32>
    %149 = vector.multi_reduction <maximumf>, %148, %cst_40 [1] : vector<16x16xf32> to vector<16xf32>
    %150 = vector.shape_cast %149 : vector<16xf32> to vector<16x1xf32>
    %151 = vector.broadcast %150 : vector<16x1xf32> to vector<16x16xf32>
    %152 = arith.subf %148, %151 : vector<16x16xf32>
    %153 = math.exp %152 : vector<16x16xf32>
    %cst_41 = arith.constant dense<0.000000e+00> : vector<16xf32>
    %154 = vector.multi_reduction <add>, %153, %cst_41 [1] : vector<16x16xf32> to vector<16xf32>
    %155 = vector.shape_cast %154 : vector<16xf32> to vector<16x1xf32>
    %156 = tpu.reciprocal %155 {approx = true} : vector<16x1xf32> -> vector<16x1xf32>
    %157 = vector.broadcast %156 : vector<16x1xf32> to vector<16x16xf32>
    %158 = arith.mulf %153, %157 : vector<16x16xf32>
    %159 = arith.truncf %158 : vector<16x16xf32> to vector<16x16xbf16>
    %160 = arith.truncf %145 : vector<16x8xf32> to vector<16x8xbf16>
    %cst_42 = arith.constant dense<0.000000e+00> : vector<16x8xf32>
    %161 = tpu.matmul %159, %160, %cst_42 {dimension_numbers = #tpu.dot_dimension_numbers<[1], [0], [0], [1], [0, 0, 1, 1], [], []>} : vector<16x16xbf16>, vector<16x8xbf16>, vector<16x8xf32> -> vector<16x8xf32>
    %162 = vector.extract_strided_slice %28 {offsets = [0, 56], sizes = [16, 8], strides = [1, 1]} : vector<16x192xf32> to vector<16x8xf32>
    %163 = vector.extract_strided_slice %28 {offsets = [0, 120], sizes = [16, 8], strides = [1, 1]} : vector<16x192xf32> to vector<16x8xf32>
    %164 = vector.extract_strided_slice %28 {offsets = [0, 184], sizes = [16, 8], strides = [1, 1]} : vector<16x192xf32> to vector<16x8xf32>
    %165 = arith.truncf %162 : vector<16x8xf32> to vector<16x8xbf16>
    %166 = arith.truncf %163 : vector<16x8xf32> to vector<16x8xbf16>
    %cst_43 = arith.constant dense<0.000000e+00> : vector<16x16xf32>
    %167 = tpu.matmul %165, %166, %cst_43 {dimension_numbers = #tpu.dot_dimension_numbers<[1], [1], [0], [0], [0, 0, 1, 0], [], []>} : vector<16x8xbf16>, vector<16x8xbf16>, vector<16x16xf32> -> vector<16x16xf32>
    %cst_44 = arith.constant dense<0xFF800000> : vector<16xf32>
    %168 = vector.multi_reduction <maximumf>, %167, %cst_44 [1] : vector<16x16xf32> to vector<16xf32>
    %169 = vector.shape_cast %168 : vector<16xf32> to vector<16x1xf32>
    %170 = vector.broadcast %169 : vector<16x1xf32> to vector<16x16xf32>
    %171 = arith.subf %167, %170 : vector<16x16xf32>
    %172 = math.exp %171 : vector<16x16xf32>
    %cst_45 = arith.constant dense<0.000000e+00> : vector<16xf32>
    %173 = vector.multi_reduction <add>, %172, %cst_45 [1] : vector<16x16xf32> to vector<16xf32>
    %174 = vector.shape_cast %173 : vector<16xf32> to vector<16x1xf32>
    %175 = tpu.reciprocal %174 {approx = true} : vector<16x1xf32> -> vector<16x1xf32>
    %176 = vector.broadcast %175 : vector<16x1xf32> to vector<16x16xf32>
    %177 = arith.mulf %172, %176 : vector<16x16xf32>
    %178 = arith.truncf %177 : vector<16x16xf32> to vector<16x16xbf16>
    %179 = arith.truncf %164 : vector<16x8xf32> to vector<16x8xbf16>
    %cst_46 = arith.constant dense<0.000000e+00> : vector<16x8xf32>
    %180 = tpu.matmul %178, %179, %cst_46 {dimension_numbers = #tpu.dot_dimension_numbers<[1], [0], [0], [1], [0, 0, 1, 1], [], []>} : vector<16x16xbf16>, vector<16x8xbf16>, vector<16x8xf32> -> vector<16x8xf32>
    %181 = tpu.concatenate %47, %66, %85, %104, %123, %142, %161, %180 in 1 : vector<16x8xf32>, vector<16x8xf32>, vector<16x8xf32>, vector<16x8xf32>, vector<16x8xf32>, vector<16x8xf32>, vector<16x8xf32>, vector<16x8xf32> -> vector<16x64xf32>
    %182 = arith.truncf %181 : vector<16x64xf32> to vector<16x64xbf16>
    %c0_47 = arith.constant 0 : index
    %c0_48 = arith.constant 0 : index
    %183 = vector.load %arg4[%c0_47, %c0_48] : memref<64x64xbf16, #tpu.memory_space<vmem>>, vector<64x64xbf16>
    %cst_49 = arith.constant dense<0.000000e+00> : vector<16x64xf32>
    %184 = tpu.matmul %182, %183, %cst_49 {dimension_numbers = #tpu.dot_dimension_numbers<[1], [0], [0], [1], [0, 0, 1, 1], [], []>} : vector<16x64xbf16>, vector<64x64xbf16>, vector<16x64xf32> -> vector<16x64xf32>
    %c0_50 = arith.constant 0 : index
    %c0_51 = arith.constant 0 : index
    %185 = vector.load %arg5[%c0_50, %c0_51] : memref<1x64xf32, #tpu.memory_space<vmem>>, vector<1x64xf32>
    %186 = vector.broadcast %185 : vector<1x64xf32> to vector<16x64xf32>
    %187 = arith.addf %184, %186 : vector<16x64xf32>
    %188 = arith.addf %1, %187 : vector<16x64xf32>
    %c0_52 = arith.constant 0 : index
    %c0_53 = arith.constant 0 : index
    %189 = vector.load %arg8[%c0_52, %c0_53] : memref<1x64xf32, #tpu.memory_space<vmem>>, vector<1x64xf32>
    %c0_54 = arith.constant 0 : index
    %c0_55 = arith.constant 0 : index
    %190 = vector.load %arg9[%c0_54, %c0_55] : memref<1x64xf32, #tpu.memory_space<vmem>>, vector<1x64xf32>
    %cst_56 = arith.constant dense<0.000000e+00> : vector<16xf32>
    %191 = vector.multi_reduction <add>, %188, %cst_56 [1] : vector<16x64xf32> to vector<16xf32>
    %192 = vector.shape_cast %191 : vector<16xf32> to vector<16x1xf32>
    %cst_57 = arith.constant 6.400000e+01 : f32
    %193 = vector.broadcast %cst_57 : f32 to vector<16x1xf32>
    %194 = arith.divf %192, %193 : vector<16x1xf32>
    %195 = vector.broadcast %194 : vector<16x1xf32> to vector<16x64xf32>
    %196 = arith.subf %188, %195 : vector<16x64xf32>
    %197 = arith.mulf %196, %196 : vector<16x64xf32>
    %cst_58 = arith.constant dense<0.000000e+00> : vector<16xf32>
    %198 = vector.multi_reduction <add>, %197, %cst_58 [1] : vector<16x64xf32> to vector<16xf32>
    %199 = vector.shape_cast %198 : vector<16xf32> to vector<16x1xf32>
    %cst_59 = arith.constant 6.400000e+01 : f32
    %200 = vector.broadcast %cst_59 : f32 to vector<16x1xf32>
    %201 = arith.divf %199, %200 : vector<16x1xf32>
    %cst_60 = arith.constant 9.99999974E-6 : f32
    %202 = vector.broadcast %cst_60 : f32 to vector<16x1xf32>
    %203 = arith.addf %201, %202 : vector<16x1xf32>
    %204 = math.rsqrt %203 : vector<16x1xf32>
    %205 = vector.broadcast %204 : vector<16x1xf32> to vector<16x64xf32>
    %206 = arith.mulf %196, %205 : vector<16x64xf32>
    %207 = vector.broadcast %189 : vector<1x64xf32> to vector<16x64xf32>
    %208 = arith.mulf %206, %207 : vector<16x64xf32>
    %209 = vector.broadcast %190 : vector<1x64xf32> to vector<16x64xf32>
    %210 = arith.addf %208, %209 : vector<16x64xf32>
    %211 = arith.truncf %210 : vector<16x64xf32> to vector<16x64xbf16>
    %c0_61 = arith.constant 0 : index
    %c0_62 = arith.constant 0 : index
    %212 = vector.load %arg10[%c0_61, %c0_62] : memref<64x256xbf16, #tpu.memory_space<vmem>>, vector<64x256xbf16>
    %cst_63 = arith.constant dense<0.000000e+00> : vector<16x256xf32>
    %213 = tpu.matmul %211, %212, %cst_63 {dimension_numbers = #tpu.dot_dimension_numbers<[1], [0], [0], [1], [0, 0, 1, 1], [], []>} : vector<16x64xbf16>, vector<64x256xbf16>, vector<16x256xf32> -> vector<16x256xf32>
    %c0_64 = arith.constant 0 : index
    %c0_65 = arith.constant 0 : index
    %214 = vector.load %arg11[%c0_64, %c0_65] : memref<1x256xf32, #tpu.memory_space<vmem>>, vector<1x256xf32>
    %215 = vector.broadcast %214 : vector<1x256xf32> to vector<16x256xf32>
    %216 = arith.addf %213, %215 : vector<16x256xf32>
    %cst_66 = arith.constant 5.000000e-01 : f32
    %217 = vector.broadcast %cst_66 : f32 to vector<16x256xf32>
    %218 = arith.mulf %217, %216 : vector<16x256xf32>
    %cst_67 = arith.constant 4.471500e-02 : f32
    %219 = vector.broadcast %cst_67 : f32 to vector<16x256xf32>
    %220 = arith.mulf %219, %216 : vector<16x256xf32>
    %221 = arith.mulf %220, %216 : vector<16x256xf32>
    %222 = arith.mulf %221, %216 : vector<16x256xf32>
    %223 = arith.addf %216, %222 : vector<16x256xf32>
    %cst_68 = arith.constant 0.797884583 : f32
    %224 = vector.broadcast %cst_68 : f32 to vector<16x256xf32>
    %225 = arith.mulf %224, %223 : vector<16x256xf32>
    %226 = math.tanh %225 : vector<16x256xf32>
    %cst_69 = arith.constant 1.000000e+00 : f32
    %227 = vector.broadcast %cst_69 : f32 to vector<16x256xf32>
    %228 = arith.addf %227, %226 : vector<16x256xf32>
    %229 = arith.mulf %218, %228 : vector<16x256xf32>
    %230 = arith.truncf %229 : vector<16x256xf32> to vector<16x256xbf16>
    %c0_70 = arith.constant 0 : index
    %c0_71 = arith.constant 0 : index
    %231 = vector.load %arg12[%c0_70, %c0_71] : memref<256x64xbf16, #tpu.memory_space<vmem>>, vector<256x64xbf16>
    %cst_72 = arith.constant dense<0.000000e+00> : vector<16x64xf32>
    %232 = tpu.matmul %230, %231, %cst_72 {dimension_numbers = #tpu.dot_dimension_numbers<[1], [0], [0], [1], [0, 0, 1, 1], [], []>} : vector<16x256xbf16>, vector<256x64xbf16>, vector<16x64xf32> -> vector<16x64xf32>
    %c0_73 = arith.constant 0 : index
    %c0_74 = arith.constant 0 : index
    %233 = vector.load %arg13[%c0_73, %c0_74] : memref<1x64xf32, #tpu.memory_space<vmem>>, vector<1x64xf32>
    %234 = vector.broadcast %233 : vector<1x64xf32> to vector<16x64xf32>
    %235 = arith.addf %232, %234 : vector<16x64xf32>
    %236 = arith.addf %188, %235 : vector<16x64xf32>
    %c0_75 = arith.constant 0 : index
    %c0_76 = arith.constant 0 : index
    %c0_77 = arith.constant 0 : index
    %237 = vector.load %arg14[%c0_75, %c0_76, %c0_77] : memref<1x16x64xf32, #tpu.memory_space<vmem>>, vector<1x16x64xf32>
    %238 = vector.shape_cast %237 : vector<1x16x64xf32> to vector<16x64xf32>
    %239 = vector.shape_cast %236 : vector<16x64xf32> to vector<1x16x64xf32>
    tpu.vector_store %arg14[%c0_75, %c0_76, %c0_77], %239 {strides = array<i32>} : memref<1x16x64xf32, #tpu.memory_space<vmem>>, vector<1x16x64xf32>,
    return
  }
  func.func @transform_0(%arg0: i32) -> (i32, i32, i32) {
    %c0_i32 = arith.constant 0 : i32
    %c0_i32_0 = arith.constant 0 : i32
    %c0_i32_1 = arith.constant 0 : i32
    return %arg0, %c0_i32, %c0_i32_0 : i32, i32, i32
  }
  func.func @transform_1(%arg0: i32) -> (i32, i32) {
    %c0_i32 = arith.constant 0 : i32
    %c0_i32_0 = arith.constant 0 : i32
    %c0_i32_1 = arith.constant 0 : i32
    return %c0_i32, %c0_i32_0 : i32, i32
  }
  func.func @transform_2(%arg0: i32) -> (i32, i32) {
    %c0_i32 = arith.constant 0 : i32
    %c0_i32_0 = arith.constant 0 : i32
    %c0_i32_1 = arith.constant 0 : i32
    return %c0_i32, %c0_i32_0 : i32, i32
  }
  func.func @transform_3(%arg0: i32) -> (i32, i32) {
    %c0_i32 = arith.constant 0 : i32
    %c0_i32_0 = arith.constant 0 : i32
    %c0_i32_1 = arith.constant 0 : i32
    return %c0_i32, %c0_i32_0 : i32, i32
  }
  func.func @transform_4(%arg0: i32) -> (i32, i32) {
    %c0_i32 = arith.constant 0 : i32
    %c0_i32_0 = arith.constant 0 : i32
    %c0_i32_1 = arith.constant 0 : i32
    return %c0_i32, %c0_i32_0 : i32, i32
  }
  func.func @transform_5(%arg0: i32) -> (i32, i32) {
    %c0_i32 = arith.constant 0 : i32
    %c0_i32_0 = arith.constant 0 : i32
    %c0_i32_1 = arith.constant 0 : i32
    return %c0_i32, %c0_i32_0 : i32, i32
  }
  func.func @transform_6(%arg0: i32) -> (i32, i32) {
    %c0_i32 = arith.constant 0 : i32
    %c0_i32_0 = arith.constant 0 : i32
    %c0_i32_1 = arith.constant 0 : i32
    return %c0_i32, %c0_i32_0 : i32, i32
  }
  func.func @transform_7(%arg0: i32) -> (i32, i32) {
    %c0_i32 = arith.constant 0 : i32
    %c0_i32_0 = arith.constant 0 : i32
    %c0_i32_1 = arith.constant 0 : i32
    return %c0_i32, %c0_i32_0 : i32, i32
  }
  func.func @transform_8(%arg0: i32) -> (i32, i32) {
    %c0_i32 = arith.constant 0 : i32
    %c0_i32_0 = arith.constant 0 : i32
    %c0_i32_1 = arith.constant 0 : i32
    return %c0_i32, %c0_i32_0 : i32, i32
  }
  func.func @transform_9(%arg0: i32) -> (i32, i32) {
    %c0_i32 = arith.constant 0 : i32
    %c0_i32_0 = arith.constant 0 : i32
    %c0_i32_1 = arith.constant 0 : i32
    return %c0_i32, %c0_i32_0 : i32, i32
  }
  func.func @transform_10(%arg0: i32) -> (i32, i32) {
    %c0_i32 = arith.constant 0 : i32
    %c0_i32_0 = arith.constant 0 : i32
    %c0_i32_1 = arith.constant 0 : i32
    return %c0_i32, %c0_i32_0 : i32, i32
  }
  func.func @transform_11(%arg0: i32) -> (i32, i32) {
    %c0_i32 = arith.constant 0 : i32
    %c0_i32_0 = arith.constant 0 : i32
    %c0_i32_1 = arith.constant 0 : i32
    return %c0_i32, %c0_i32_0 : i32, i32
  }
  func.func @transform_12(%arg0: i32) -> (i32, i32) {
    %c0_i32 = arith.constant 0 : i32
    %c0_i32_0 = arith.constant 0 : i32
    %c0_i32_1 = arith.constant 0 : i32
    return %c0_i32, %c0_i32_0 : i32, i32
  }
  func.func @transform_13(%arg0: i32) -> (i32, i32, i32) {
    %c0_i32 = arith.constant 0 : i32
    %c0_i32_0 = arith.constant 0 : i32
    %c0_i32_1 = arith.constant 0 : i32
    return %arg0, %c0_i32, %c0_i32_0 : i32, i32, i32
  }
}

</mosaic_0001>

<llo_original>
// kernel: encoder_layer_fwd.1
$region0: #{encoder_layer_fwd.1}
  #allocation0 [shape = 'u32[]', space=smem, size = 0x4, offset = 0x4, fixed_abs, tag = 'smem constant byte address 0x4 - core index']
  #allocation1 [shape = 'u32[144,128]{1,0:T(1,128)}', space=vmem, size = 0x12000, scoped, tag = 'internal scratch']
  %s0 = inlined_call_operand.vmem [shape: f32[2,16,64], index: 0, kind: input, shape index: {}]
  %s1 = inlined_call_operand.vmem [shape: f32[16,192], index: 1, kind: input, shape index: {}]
  %s2 = inlined_call_operand.vmem [shape: bf16[64,192], index: 2, kind: input, shape index: {}]
  %s3 = inlined_call_operand.vmem [shape: bf16[64,64], index: 3, kind: input, shape index: {}]
  %s4 = inlined_call_operand.vmem [shape: f32[1,64], index: 4, kind: input, shape index: {}]
  %s5 = inlined_call_operand.vmem [shape: f32[1,64], index: 5, kind: input, shape index: {}]
  %s6 = inlined_call_operand.vmem [shape: f32[1,64], index: 6, kind: input, shape index: {}]
  %s7 = inlined_call_operand.vmem [shape: f32[1,64], index: 7, kind: input, shape index: {}]
  %s8 = inlined_call_operand.vmem [shape: f32[1,64], index: 8, kind: input, shape index: {}]
  %s9 = inlined_call_operand.vmem [shape: bf16[64,256], index: 9, kind: input, shape index: {}]
  %s10 = inlined_call_operand.vmem [shape: f32[1,256], index: 10, kind: input, shape index: {}]
  %s11 = inlined_call_operand.vmem [shape: bf16[256,64], index: 11, kind: input, shape index: {}]
  %s12 = inlined_call_operand.vmem [shape: f32[1,64], index: 12, kind: input, shape index: {}]
  %s13 = inlined_call_operand.hbm [shape: f32[2,16,64], index: 13, kind: output, shape index: {}]
  %s14 = sld [smem:[#allocation0]]
  $region85: #{encoder_layer_fwd.1} parent=0
    _
  %s16 = ssub.s32 1, %s14
  %s17 = scalar_select 0, %s16, %s14
  $region1: #{encoder_layer_fwd.1} parent=0
    #allocation2 [shape = 'u8[16384]{0}', space=vmem, size = 0x4000, scoped, tag = 'output window, operand 0']
    #allocation3 [shape = 's32[2]{0}', space=sflag, size = 0x8, scoped, tag = 'scoped memory for encoder_layer_fwd.1']
    %18 = vsyncpa [#allocation3], 0
    %s19 = scalar_lea.sflag [#allocation3], 1
    %20 = vsyncpa %s19, 0
    loop: start=0, step=1, limit=4
    $region2: #{encoder_layer_fwd.1} parent=1 // loop_pre_header
      _
    $region3: #{encoder_layer_fwd.1} parent=1 // loop_header
      %s22 = sphi 0, %s26
      %p23 = scmp.ge.s32.totalorder %s22, 4
      %s32 = sphi 0, %s34
      %s35 = sphi 0, %s32
      %s36 = sphi 0, %s35
      %s52 = sphi 0, %s36
      %s56 = sphi 0, %s56
      %s58 = sphi 0, %s56
      %s59 = sphi 0, %s58
      %s73 = sphi 0, %s59
      %s77 = sphi 0, %s77
      %s79 = sphi 0, %s77
      %s80 = sphi 0, %s79
      %s94 = sphi 0, %s80
      %s98 = sphi 0, %s98
      %s100 = sphi 0, %s98
      %s101 = sphi 0, %s100
      %s115 = sphi 0, %s101
      %s119 = sphi 0, %s119
      %s121 = sphi 0, %s119
      %s122 = sphi 0, %s121
      %s136 = sphi 0, %s122
      %s140 = sphi 0, %s140
      %s142 = sphi 0, %s140
      %s143 = sphi 0, %s142
      %s157 = sphi 0, %s143
      %s161 = sphi 0, %s161
      %s163 = sphi 0, %s161
      %s164 = sphi 0, %s163
      %s178 = sphi 0, %s164
      %s182 = sphi 0, %s182
      %s184 = sphi 0, %s182
      %s185 = sphi 0, %s184
      %s199 = sphi 0, %s185
      %s203 = sphi 0, %s203
      %s205 = sphi 0, %s203
      %s206 = sphi 0, %s205
      %s220 = sphi 0, %s206
      %s224 = sphi 0, %s224
      %s226 = sphi 0, %s224
      %s227 = sphi 0, %s226
      %s241 = sphi 0, %s227
      %s245 = sphi 0, %s245
      %s247 = sphi 0, %s245
      %s248 = sphi 0, %s247
      %s262 = sphi 0, %s248
      %s266 = sphi 0, %s266
      %s268 = sphi 0, %s266
      %s269 = sphi 0, %s268
      %s283 = sphi 0, %s269
      %s287 = sphi 0, %s287
      %s289 = sphi 0, %s287
      %s290 = sphi 0, %s289
      %s304 = sphi 0, %s290
      %s310 = sphi 0, %s312
      %s313 = sphi 0, %s310
      %s314 = sphi 0, %s313
      %s330 = sphi 0, %s314
    $region4: #{encoder_layer_fwd.1} parent=1 // loop_header_branch
      %25 = sbr.rel (%p23) target = $region8
    $region5: #{encoder_layer_fwd.1} parent=1 // loop_body
      %s27 = ssub.s32 %s22, 1
      %s28 = ssub.s32 %s22, 2
      %s29 = sadd.s32 %s22, 1
      %s30 = ssub.s32 %s22, %s29
      %p31 = scmp.eq.s32.totalorder %s30, 0
      %s33 = sadd.s32 %s32, 1
      %s34 = scalar_select %p31, %s32, %s33
      %p37 = pneg %p31
      %p38 = scmp.eq.s32.totalorder %s22, 1
      %p39 = por %p37, %p38
      %p40 = scmp.ne.s32.totalorder %s32, %s35
      %p41 = scmp.eq.s32.totalorder %s22, 0
      %p42 = por %p40, %p41
      %p43 = scmp.ne.s32.totalorder %s32, %s35
      %p44 = scmp.eq.s32.totalorder %s27, 1
      %p45 = por %p43, %p44
      %p46 = scmp.ne.s32.totalorder %s35, %s36
      %p47 = scmp.eq.s32.totalorder %s27, 0
      %p48 = por %p46, %p47
      %p49 = scmp.ne.s32.totalorder %s35, %s36
      %p50 = scmp.eq.s32.totalorder %s28, 1
      %p51 = por %p49, %p50
      %p53 = scmp.ne.s32.totalorder %s36, %s52
      %p54 = scmp.eq.s32.totalorder %s28, 0
      %p55 = por %p53, %p54
      %s57 = sadd.s32 %s56, 1
      %p60 = scmp.eq.s32.totalorder %s22, 1
      %p61 = scmp.ne.s32.totalorder %s56, %s58
      %p62 = scmp.eq.s32.totalorder %s22, 0
      %p63 = por %p61, %p62
      %p64 = scmp.ne.s32.totalorder %s56, %s58
      %p65 = scmp.eq.s32.totalorder %s27, 1
      %p66 = por %p64, %p65
      %p67 = scmp.ne.s32.totalorder %s58, %s59
      %p68 = scmp.eq.s32.totalorder %s27, 0
      %p69 = por %p67, %p68
      %p70 = scmp.ne.s32.totalorder %s58, %s59
      %p71 = scmp.eq.s32.totalorder %s28, 1
      %p72 = por %p70, %p71
      %p74 = scmp.ne.s32.totalorder %s59, %s73
      %p75 = scmp.eq.s32.totalorder %s28, 0
      %p76 = por %p74, %p75
      %s78 = sadd.s32 %s77, 1
      %p81 = scmp.eq.s32.totalorder %s22, 1
      %p82 = scmp.ne.s32.totalorder %s77, %s79
      %p83 = scmp.eq.s32.totalorder %s22, 0
      %p84 = por %p82, %p83
      %p85 = scmp.ne.s32.totalorder %s77, %s79
      %p86 = scmp.eq.s32.totalorder %s27, 1
      %p87 = por %p85, %p86
      %p88 = scmp.ne.s32.totalorder %s79, %s80
      %p89 = scmp.eq.s32.totalorder %s27, 0
      %p90 = por %p88, %p89
      %p91 = scmp.ne.s32.totalorder %s79, %s80
      %p92 = scmp.eq.s32.totalorder %s28, 1
      %p93 = por %p91, %p92
      %p95 = scmp.ne.s32.totalorder %s80, %s94
      %p96 = scmp.eq.s32.totalorder %s28, 0
      %p97 = por %p95, %p96
      %s99 = sadd.s32 %s98, 1
      %p102 = scmp.eq.s32.totalorder %s22, 1
      %p103 = scmp.ne.s32.totalorder %s98, %s100
      %p104 = scmp.eq.s32.totalorder %s22, 0
      %p105 = por %p103, %p104
      %p106 = scmp.ne.s32.totalorder %s98, %s100
      %p107 = scmp.eq.s32.totalorder %s27, 1
      %p108 = por %p106, %p107
      %p109 = scmp.ne.s32.totalorder %s100, %s101
      %p110 = scmp.eq.s32.totalorder %s27, 0
      %p111 = por %p109, %p110
      %p112 = scmp.ne.s32.totalorder %s100, %s101
      %p113 = scmp.eq.s32.totalorder %s28, 1
      %p114 = por %p112, %p113
      %p116 = scmp.ne.s32.totalorder %s101, %s115
      %p117 = scmp.eq.s32.totalorder %s28, 0
      %p118 = por %p116, %p117
      %s120 = sadd.s32 %s119, 1
      %p123 = scmp.eq.s32.totalorder %s22, 1
      %p124 = scmp.ne.s32.totalorder %s119, %s121
      %p125 = scmp.eq.s32.totalorder %s22, 0
      %p126 = por %p124, %p125
      %p127 = scmp.ne.s32.totalorder %s119, %s121
      %p128 = scmp.eq.s32.totalorder %s27, 1
      %p129 = por %p127, %p128
      %p130 = scmp.ne.s32.totalorder %s121, %s122
      %p131 = scmp.eq.s32.totalorder %s27, 0
      %p132 = por %p130, %p131
      %p133 = scmp.ne.s32.totalorder %s121, %s122
      %p134 = scmp.eq.s32.totalorder %s28, 1
      %p135 = por %p133, %p134
      %p137 = scmp.ne.s32.totalorder %s122, %s136
      %p138 = scmp.eq.s32.totalorder %s28, 0
      %p139 = por %p137, %p138
      %s141 = sadd.s32 %s140, 1
      %p144 = scmp.eq.s32.totalorder %s22, 1
      %p145 = scmp.ne.s32.totalorder %s140, %s142
      %p146 = scmp.eq.s32.totalorder %s22, 0
      %p147 = por %p145, %p146
      %p148 = scmp.ne.s32.totalorder %s140, %s142
      %p149 = scmp.eq.s32.totalorder %s27, 1
      %p150 = por %p148, %p149
      %p151 = scmp.ne.s32.totalorder %s142, %s143
      %p152 = scmp.eq.s32.totalorder %s27, 0
      %p153 = por %p151, %p152
      %p154 = scmp.ne.s32.totalorder %s142, %s143
      %p155 = scmp.eq.s32.totalorder %s28, 1
      %p156 = por %p154, %p155
      %p158 = scmp.ne.s32.totalorder %s143, %s157
      %p159 = scmp.eq.s32.totalorder %s28, 0
      %p160 = por %p158, %p159
      %s162 = sadd.s32 %s161, 1
      %p165 = scmp.eq.s32.totalorder %s22, 1
      %p166 = scmp.ne.s32.totalorder %s161, %s163
      %p167 = scmp.eq.s32.totalorder %s22, 0
      %p168 = por %p166, %p167
      %p169 = scmp.ne.s32.totalorder %s161, %s163
      %p170 = scmp.eq.s32.totalorder %s27, 1
      %p171 = por %p169, %p170
      %p172 = scmp.ne.s32.totalorder %s163, %s164
      %p173 = scmp.eq.s32.totalorder %s27, 0
      %p174 = por %p172, %p173
      %p175 = scmp.ne.s32.totalorder %s163, %s164
      %p176 = scmp.eq.s32.totalorder %s28, 1
      %p177 = por %p175, %p176
      %p179 = scmp.ne.s32.totalorder %s164, %s178
      %p180 = scmp.eq.s32.totalorder %s28, 0
      %p181 = por %p179, %p180
      %s183 = sadd.s32 %s182, 1
      %p186 = scmp.eq.s32.totalorder %s22, 1
      %p187 = scmp.ne.s32.totalorder %s182, %s184
      %p188 = scmp.eq.s32.totalorder %s22, 0
      %p189 = por %p187, %p188
      %p190 = scmp.ne.s32.totalorder %s182, %s184
      %p191 = scmp.eq.s32.totalorder %s27, 1
      %p192 = por %p190, %p191
      %p193 = scmp.ne.s32.totalorder %s184, %s185
      %p194 = scmp.eq.s32.totalorder %s27, 0
      %p195 = por %p193, %p194
      %p196 = scmp.ne.s32.totalorder %s184, %s185
      %p197 = scmp.eq.s32.totalorder %s28, 1
      %p198 = por %p196, %p197
      %p200 = scmp.ne.s32.totalorder %s185, %s199
      %p201 = scmp.eq.s32.totalorder %s28, 0
      %p202 = por %p200, %p201
      %s204 = sadd.s32 %s203, 1
      %p207 = scmp.eq.s32.totalorder %s22, 1
      %p208 = scmp.ne.s32.totalorder %s203, %s205
      %p209 = scmp.eq.s32.totalorder %s22, 0
      %p210 = por %p208, %p209
      %p211 = scmp.ne.s32.totalorder %s203, %s205
      %p212 = scmp.eq.s32.totalorder %s27, 1
      %p213 = por %p211, %p212
      %p214 = scmp.ne.s32.totalorder %s205, %s206
      %p215 = scmp.eq.s32.totalorder %s27, 0
      %p216 = por %p214, %p215
      %p217 = scmp.ne.s32.totalorder %s205, %s206
      %p218 = scmp.eq.s32.totalorder %s28, 1
      %p219 = por %p217, %p218
      %p221 = scmp.ne.s32.totalorder %s206, %s220
      %p222 = scmp.eq.s32.totalorder %s28, 0
      %p223 = por %p221, %p222
      %s225 = sadd.s32 %s224, 1
      %p228 = scmp.eq.s32.totalorder %s22, 1
      %p229 = scmp.ne.s32.totalorder %s224, %s226
      %p230 = scmp.eq.s32.totalorder %s22, 0
      %p231 = por %p229, %p230
      %p232 = scmp.ne.s32.totalorder %s224, %s226
      %p233 = scmp.eq.s32.totalorder %s27, 1
      %p234 = por %p232, %p233
      %p235 = scmp.ne.s32.totalorder %s226, %s227
      %p236 = scmp.eq.s32.totalorder %s27, 0
      %p237 = por %p235, %p236
      %p238 = scmp.ne.s32.totalorder %s226, %s227
      %p239 = scmp.eq.s32.totalorder %s28, 1
      %p240 = por %p238, %p239
      %p242 = scmp.ne.s32.totalorder %s227, %s241
      %p243 = scmp.eq.s32.totalorder %s28, 0
      %p244 = por %p242, %p243
      %s246 = sadd.s32 %s245, 1
      %p249 = scmp.eq.s32.totalorder %s22, 1
      %p250 = scmp.ne.s32.totalorder %s245, %s247
      %p251 = scmp.eq.s32.totalorder %s22, 0
      %p252 = por %p250, %p251
      %p253 = scmp.ne.s32.totalorder %s245, %s247
      %p254 = scmp.eq.s32.totalorder %s27, 1
      %p255 = por %p253, %p254
      %p256 = scmp.ne.s32.totalorder %s247, %s248
      %p257 = scmp.eq.s32.totalorder %s27, 0
      %p258 = por %p256, %p257
      %p259 = scmp.ne.s32.totalorder %s247, %s248
      %p260 = scmp.eq.s32.totalorder %s28, 1
      %p261 = por %p259, %p260
      %p263 = scmp.ne.s32.totalorder %s248, %s262
      %p264 = scmp.eq.s32.totalorder %s28, 0
      %p265 = por %p263, %p264
      %s267 = sadd.s32 %s266, 1
      %p270 = scmp.eq.s32.totalorder %s22, 1
      %p271 = scmp.ne.s32.totalorder %s266, %s268
      %p272 = scmp.eq.s32.totalorder %s22, 0
      %p273 = por %p271, %p272
      %p274 = scmp.ne.s32.totalorder %s266, %s268
      %p275 = scmp.eq.s32.totalorder %s27, 1
      %p276 = por %p274, %p275
      %p277 = scmp.ne.s32.totalorder %s268, %s269
      %p278 = scmp.eq.s32.totalorder %s27, 0
      %p279 = por %p277, %p278
      %p280 = scmp.ne.s32.totalorder %s268, %s269
      %p281 = scmp.eq.s32.totalorder %s28, 1
      %p282 = por %p280, %p281
      %p284 = scmp.ne.s32.totalorder %s269, %s283
      %p285 = scmp.eq.s32.totalorder %s28, 0
      %p286 = por %p284, %p285
      %s288 = sadd.s32 %s287, 1
      %p291 = scmp.eq.s32.totalorder %s22, 1
      %p292 = scmp.ne.s32.totalorder %s287, %s289
      %p293 = scmp.eq.s32.totalorder %s22, 0
      %p294 = por %p292, %p293
      %p295 = scmp.ne.s32.totalorder %s287, %s289
      %p296 = scmp.eq.s32.totalorder %s27, 1
      %p297 = por %p295, %p296
      %p298 = scmp.ne.s32.totalorder %s289, %s290
      %p299 = scmp.eq.s32.totalorder %s27, 0
      %p300 = por %p298, %p299
      %p301 = scmp.ne.s32.totalorder %s289, %s290
      %p302 = scmp.eq.s32.totalorder %s28, 1
      %p303 = por %p301, %p302
      %p305 = scmp.ne.s32.totalorder %s290, %s304
      %p306 = scmp.eq.s32.totalorder %s28, 0
      %p307 = por %p305, %p306
      %s308 = ssub.s32 %s22, %s29
      %p309 = scmp.eq.s32.totalorder %s308, 0
      %s311 = sadd.s32 %s310, 1
      %s312 = scalar_select %p309, %s310, %s311
      %p315 = pneg %p309
      %p316 = scmp.eq.s32.totalorder %s22, 1
      %p317 = por %p315, %p316
      %p318 = scmp.ne.s32.totalorder %s310, %s313
      %p319 = scmp.eq.s32.totalorder %s22, 0
      %p320 = por %p318, %p319
      %p321 = scmp.ne.s32.totalorder %s310, %s313
      %p322 = scmp.eq.s32.totalorder %s27, 1
      %p323 = por %p321, %p322
      %p324 = scmp.ne.s32.totalorder %s313, %s314
      %p325 = scmp.eq.s32.totalorder %s27, 0
      %p326 = por %p324, %p325
      %p327 = scmp.ne.s32.totalorder %s313, %s314
      %p328 = scmp.eq.s32.totalorder %s28, 1
      %p329 = por %p327, %p328
      %p331 = scmp.ne.s32.totalorder %s314, %s330
      %p332 = scmp.eq.s32.totalorder %s28, 0
      %p333 = por %p331, %p332
      %p334 = scmp.le.s32.totalorder 1, %s22
      %p335 = scmp.lt.s32.totalorder %s22, 3
      %p336 = pnand %p334, %p335
      %p337 = pneg %p336
      // Predicated region
      $region9: #{encoder_layer_fwd.1} parent=5 // pred_check
        _
      $region10: #{encoder_layer_fwd.1} parent=5 // pred_check_branch
        %339 = sbr.rel (%p336) target = $region12
      $region11: #{encoder_layer_fwd.1} parent=5 // pred_region
        %s340 = ssub.s32 %s22, 1
        // Predicated region
        $region13: #{encoder_layer_fwd.1} parent=11 // pred_check
          %p341 = pneg %p69
        $region14: #{encoder_layer_fwd.1} parent=11 // pred_check_branch
          %343 = sbr.rel (%p341) target = $region16
        $region15: #{encoder_layer_fwd.1} parent=11 // pred_region
          _
        $region16: #{encoder_layer_fwd.1} parent=11 // pred_fallthru
          _
        // Predicated region
        $region17: #{encoder_layer_fwd.1} parent=11 // pred_check
          %p344 = pneg %p90
        $region18: #{encoder_layer_fwd.1} parent=11 // pred_check_branch
          %346 = sbr.rel (%p344) target = $region20
        $region19: #{encoder_layer_fwd.1} parent=11 // pred_region
          _
        $region20: #{encoder_layer_fwd.1} parent=11 // pred_fallthru
          _
        // Predicated region
        $region21: #{encoder_layer_fwd.1} parent=11 // pred_check
          %p347 = pneg %p111
        $region22: #{encoder_layer_fwd.1} parent=11 // pred_check_branch
          %349 = sbr.rel (%p347) target = $region24
        $region23: #{encoder_layer_fwd.1} parent=11 // pred_region
          _
        $region24: #{encoder_layer_fwd.1} parent=11 // pred_fallthru
          _
        // Predicated region
        $region25: #{encoder_layer_fwd.1} parent=11 // pred_check
          %p350 = pneg %p132
        $region26: #{encoder_layer_fwd.1} parent=11 // pred_check_branch
          %352 = sbr.rel (%p350) target = $region28
        $region27: #{encoder_layer_fwd.1} parent=11 // pred_region
          _
        $region28: #{encoder_layer_fwd.1} parent=11 // pred_fallthru
          _
        // Predicated region
        $region29: #{encoder_layer_fwd.1} parent=11 // pred_check
          %p353 = pneg %p153
        $region30: #{encoder_layer_fwd.1} parent=11 // pred_check_branch
          %355 = sbr.rel (%p353) target = $region32
        $region31: #{encoder_layer_fwd.1} parent=11 // pred_region
          _
        $region32: #{encoder_layer_fwd.1} parent=11 // pred_fallthru
          _
        // Predicated region
        $region33: #{encoder_layer_fwd.1} parent=11 // pred_check
          %p356 = pneg %p174
        $region34: #{encoder_layer_fwd.1} parent=11 // pred_check_branch
          %358 = sbr.rel (%p356) target = $region36
        $region35: #{encoder_layer_fwd.1} parent=11 // pred_region
          _
        $region36: #{encoder_layer_fwd.1} parent=11 // pred_fallthru
          _
        // Predicated region
        $region37: #{encoder_layer_fwd.1} parent=11 // pred_check
          %p359 = pneg %p195
        $region38: #{encoder_layer_fwd.1} parent=11 // pred_check_branch
          %361 = sbr.rel (%p359) target = $region40
        $region39: #{encoder_layer_fwd.1} parent=11 // pred_region
          _
        $region40: #{encoder_layer_fwd.1} parent=11 // pred_fallthru
          _
        // Predicated region
        $region41: #{encoder_layer_fwd.1} parent=11 // pred_check
          %p362 = pneg %p216
        $region42: #{encoder_layer_fwd.1} parent=11 // pred_check_branch
          %364 = sbr.rel (%p362) target = $region44
        $region43: #{encoder_layer_fwd.1} parent=11 // pred_region
          _
        $region44: #{encoder_layer_fwd.1} parent=11 // pred_fallthru
          _
        // Predicated region
        $region45: #{encoder_layer_fwd.1} parent=11 // pred_check
          %p365 = pneg %p237
        $region46: #{encoder_layer_fwd.1} parent=11 // pred_check_branch
          %367 = sbr.rel (%p365) target = $region48
        $region47: #{encoder_layer_fwd.1} parent=11 // pred_region
          _
        $region48: #{encoder_layer_fwd.1} parent=11 // pred_fallthru
          _
        // Predicated region
        $region49: #{encoder_layer_fwd.1} parent=11 // pred_check
          %p368 = pneg %p258
        $region50: #{encoder_layer_fwd.1} parent=11 // pred_check_branch
          %370 = sbr.rel (%p368) target = $region52
        $region51: #{encoder_layer_fwd.1} parent=11 // pred_region
          _
        $region52: #{encoder_layer_fwd.1} parent=11 // pred_fallthru
          _
        // Predicated region
        $region53: #{encoder_layer_fwd.1} parent=11 // pred_check
          %p371 = pneg %p279
        $region54: #{encoder_layer_fwd.1} parent=11 // pred_check_branch
          %373 = sbr.rel (%p371) target = $region56
        $region55: #{encoder_layer_fwd.1} parent=11 // pred_region
          _
        $region56: #{encoder_layer_fwd.1} parent=11 // pred_fallthru
          _
        // Predicated region
        $region57: #{encoder_layer_fwd.1} parent=11 // pred_check
          %p374 = pneg %p300
        $region58: #{encoder_layer_fwd.1} parent=11 // pred_check_branch
          %376 = sbr.rel (%p374) target = $region60
        $region59: #{encoder_layer_fwd.1} parent=11 // pred_region
          _
        $region60: #{encoder_layer_fwd.1} parent=11 // pred_fallthru
          _
      $region12: #{encoder_layer_fwd.1} parent=5 // pred_fallthru
        _
      %p377 = scmp.lt.s32.totalorder %s22, 2
      // Predicated region
      $region61: #{encoder_layer_fwd.1} parent=5 // pred_check
        %p378 = pneg %p377
      $region62: #{encoder_layer_fwd.1} parent=5 // pred_check_branch
        %380 = sbr.rel (%p378) target = $region64
      $region63: #{encoder_layer_fwd.1} parent=5 // pred_region
        // Predicated region
        $region65: #{encoder_layer_fwd.1} parent=63 // pred_check
          %p381 = pneg %p42
        $region66: #{encoder_layer_fwd.1} parent=63 // pred_check_branch
          %383 = sbr.rel (%p381) target = $region68
        $region67: #{encoder_layer_fwd.1} parent=63 // pred_region
          %p384 = scmp.lt.s32.totalorder %s22, 1
          %s385 = scalar_select %p384, %s22, 1
          %s386 = smul.addr %s385, 2
          %s387 = smul.addr %s386, 8
          %s388 = scalar_lea.vmem %s0, %s387
        $region68: #{encoder_layer_fwd.1} parent=63 // pred_fallthru
          _
      $region64: #{encoder_layer_fwd.1} parent=5 // pred_fallthru
        _
      %p389 = scmp.le.s32.totalorder 1, %s22
      %p390 = scmp.lt.s32.totalorder %s22, 3
      %p391 = pnand %p389, %p390
      %p392 = pneg %p391
      // Predicated region
      $region69: #{encoder_layer_fwd.1} parent=5 // pred_check
        _
      $region70: #{encoder_layer_fwd.1} parent=5 // pred_check_branch
        %394 = sbr.rel (%p391) target = $region72
      $region71: #{encoder_layer_fwd.1} parent=5 // pred_region
        %s395 = ssub.s32 %s22, 1
        %p396 = scmp.lt.s32.totalorder %s27, 1
        %s397 = scalar_select %p396, %s27, 1
        %s398 = smul.addr %s397, 2
        %s399 = smul.addr %s398, 8
        %s400 = scalar_lea.vmem %s0, %s399
        %p401 = pneg %p48
        %p402 = pneg %p45
        %p403 = pneg %p69
        %p404 = pneg %p66
        %p405 = pneg %p90
        %p406 = pneg %p87
        %p407 = pneg %p111
        %p408 = pneg %p108
        %p409 = pneg %p132
        %p410 = pneg %p129
        %p411 = pneg %p153
        %p412 = pneg %p150
        %p413 = pneg %p174
        %p414 = pneg %p171
        %p415 = pneg %p195
        %p416 = pneg %p192
        %p417 = pneg %p216
        %p418 = pneg %p213
        %p419 = pneg %p237
        %p420 = pneg %p234
        %p421 = pneg %p258
        %p422 = pneg %p255
        %p423 = pneg %p279
        %p424 = pneg %p276
        %p425 = pneg %p300
        %p426 = pneg %p297
        %p427 = pneg %p326
        %p428 = pneg %p323
        %s429 = sand.u32 %s313, 1
        %s430 = scalar_lea.sflag [#allocation3], %s429
        %s431 = sand.u32 %s313, 1
        %s432 = smul.addr %s431, 16
        %s433 = scalar_lea.vmem [#allocation2], %s432
        %p434 = scmp.lt.s32.totalorder %s27, 1
        %s435 = scalar_select %p434, %s27, 1
        %s436 = smul.addr %s435, 2
        %s437 = smul.addr %s436, 8
        %s438 = scalar_lea.vmem %s0, %s437
        %v440 = vld [vmem:[%s438] sm:$0xff]
        %v441 = vld [vmem:[%s438 + $0x8] sm:$0xff]
        %v442 = vld [vmem:[%s5] sm:$0x1]
        %v443 = vld [vmem:[%s6] sm:$0x1]
        %vm444 = vcmask 523264
        %v445 = vsel %vm444, %v440, 0.0
        %446 = vadd.xlane.f32.xlu0 %v445
        %v447 = vpop.xlane.xlu0 %446
        %v448 = vsel %vm444, %v441, 0.0
        %449 = vadd.xlane.f32.xlu0 %v448
        %v450 = vpop.xlane.xlu0 %449
        %v451 = vrcp.pop 64.0
        %v452 = vmul.f32 %v447, %v451
        %v453 = vmul.f32 %v450, %v451
        %v454 = vsub.f32 %v440, %v452
        %v455 = vsub.f32 %v441, %v453
        %v456 = vmul.f32 %v454, %v454
        %v457 = vmul.f32 %v455, %v455
        %v458 = vsel %vm444, %v456, 0.0
        %459 = vadd.xlane.f32.xlu0 %v458
        %v460 = vpop.xlane.xlu0 %459
        %v461 = vsel %vm444, %v457, 0.0
        %462 = vadd.xlane.f32.xlu0 %v461
        %v463 = vpop.xlane.xlu0 %462
        %v464 = vmul.f32 %v460, %v451
        %v465 = vmul.f32 %v463, %v451
        %v466 = vadd.f32 %v464, 1e-05
        %v467 = vadd.f32 %v465, 1e-05
        %v468 = vrsqrt.pop %v466
        %v469 = vrsqrt.pop %v467
        %v470 = vmul.f32 %v454, %v468
        %v471 = vmul.f32 %v455, %v469
        %v473 = vlaneseq
        %v474 = vshrl.u32 %v473, 7
        %v475 = vsub.s32 0, %v474
        %v476 = vrot.slane %v442, %v475
        %v478 = vmul.f32 %v470, %v476
        %v479 = vmul.f32 %v471, %v476
        %v481 = vlaneseq
        %v482 = vshrl.u32 %v481, 7
        %v483 = vsub.s32 0, %v482
        %v484 = vrot.slane %v443, %v483
        %v486 = vadd.f32 %v478, %v484
        %v487 = vadd.f32 %v479, %v484
        %v488 = vpack.c.bf16 %v487, %v486
        %v489 = vld [vmem:[%s2] sm:$0xff]
        %v490 = vld [vmem:[%s2 + $0x8] sm:$0xff]
        %v491 = vld [vmem:[%s2 + $0x10] sm:$0xff]
        %v492 = vld [vmem:[%s2 + $0x18] sm:$0xff]
        %v493 = vld [vmem:[%s2 + $0x20] sm:$0xff]
        %v494 = vld [vmem:[%s2 + $0x28] sm:$0xff]
        %v495 = vld [vmem:[%s2 + $0x30] sm:$0xff]
        %v496 = vld [vmem:[%s2 + $0x38] sm:$0xff]
        %v497 = vld [vmem:[%s1] sm:$0xff]
        %v498 = vld [vmem:[%s1 + $0x8] sm:$0xff]
        %v499 = vld [vmem:[%s1 + $0x10] sm:$0xff]
        %v500 = vld [vmem:[%s1 + $0x18] sm:$0xff]
        %v509 = vunpack.c.l.b16 %v489
        %v510 = vunpack.c.h.b16 %v489
        %v511 = vunpack.c.l.b16 %v490
        %v512 = vunpack.c.h.b16 %v490
        %v513 = vunpack.c.l.b16 %v491
        %v514 = vunpack.c.h.b16 %v491
        %v515 = vunpack.c.l.b16 %v492
        %v516 = vunpack.c.h.b16 %v492
        %v517 = vunpack.c.l.b16 %v493
        %v518 = vunpack.c.h.b16 %v493
        %v519 = vunpack.c.l.b16 %v494
        %v520 = vunpack.c.h.b16 %v494
        %v521 = vunpack.c.l.b16 %v495
        %v522 = vunpack.c.h.b16 %v495
        %v523 = vunpack.c.l.b16 %v496
        %v524 = vunpack.c.h.b16 %v496
        %v525 = vpack.c.b16 %v511, %v509
        %v526 = vpack.c.b16 %v512, %v510
        %v527 = vpack.c.b16 %v515, %v513
        %v528 = vpack.c.b16 %v516, %v514
        %v529 = vpack.c.b16 %v519, %v517
        %v530 = vpack.c.b16 %v520, %v518
        %v531 = vpack.c.b16 %v523, %v521
        %v532 = vpack.c.b16 %v524, %v522
        %v542 = vsel %vm444, %v488, 0
        %544 = vmatprep.subr.bf16.mxu0 0
        %545 = vmatpush1.bf16.msra.mxu0 0
        %546 = vmatprep.subr.bf16.mxu0 0
        %547 = vmatpush1.bf16.msra.mxu0 0
        %548 = vmatprep.subr.bf16.mxu0 0
        %549 = vmatpush1.bf16.msra.mxu0 0
        %550 = vmatprep.subr.bf16.mxu0 0
        %551 = vmatpush1.bf16.msra.mxu0 0
        %552 = vmatprep.subr.bf16.mxu0 %v532
        %553 = vmatpush1.bf16.msra.mxu0 %v531
        %554 = vmatprep.subr.bf16.mxu0 %v530
        %555 = vmatpush1.bf16.msra.mxu0 %v529
        %556 = vmatprep.subr.bf16.mxu0 %v528
        %557 = vmatpush1.bf16.msra.mxu0 %v527
        %558 = vmatprep.subr.bf16.mxu0 %v526
        %559 = vmatpush1.bf16.msra.mxu0 %v525
        %560 = vmatprep.subr.bf16.mxu0 0
        %561 = vmatpush2.bf16.msra.mxu0 0
        %562 = vmatprep.subr.bf16.mxu0 0
        %563 = vmatpush2.bf16.msra.mxu0 0
        %564 = vmatprep.subr.bf16.mxu0 0
        %565 = vmatpush2.bf16.msra.mxu0 0
        %566 = vmatprep.subr.bf16.mxu0 0
        %567 = vmatpush2.bf16.msra.mxu0 0
        %568 = vmatprep.subr.bf16.mxu0 0
        %569 = vmatpush2.bf16.msra.mxu0 0
        %570 = vmatprep.subr.bf16.mxu0 0
        %571 = vmatpush2.bf16.msra.mxu0 0
        %572 = vmatprep.subr.bf16.mxu0 0
        %573 = vmatpush2.bf16.msra.mxu0 0
        %574 = vmatprep.subr.bf16.mxu0 0
        %575 = vmatpush2.bf16.msra.mxu0 0
        %576 = vmatprep.mubr.bf16.mxu0 0
        %577 = vmatmul.mubr.bf16.gmra.mxu0 %v542
        %v578 = vpop.f32.mrf.mxu0
        %v579 = vadd.f32 %v497, %v578
        %v580 = vpop.f32.mrf.mxu0
        %v581 = vadd.f32 %v498, %v580
        %v582 = vpop.f32.mrf.mxu0
        %v583 = vadd.f32 %v499, %v582
        %v584 = vpop.f32.mrf.mxu0
        %v585 = vadd.f32 %v500, %v584
        %586 = vdwg.mxu0
        %v587 = vpack.c.bf16 %v583, %v579
        %589 = vrot.lane.b32.xlu0 %v587, 64
        %v590 = vpop.permute.xlu0 %589
        %vm591 = vcmask 64512
        %v593 = vsel %vm591, %v587, 0
        %v596 = vsel %vm591, %v590, 0
        %598 = vmatprep.subr.bf16.mxu0 0
        %599 = vmatpush1.bf16.xpose.msra.mxu0 0
        %600 = vmatprep.subr.bf16.mxu0 0
        %601 = vmatpush1.bf16.xpose.msra.mxu0 0
        %602 = vmatprep.subr.bf16.mxu0 0
        %603 = vmatpush1.bf16.xpose.msra.mxu0 0
        %604 = vmatprep.subr.bf16.mxu0 0
        %605 = vmatpush1.bf16.xpose.msra.mxu0 0
        %606 = vmatprep.subr.bf16.mxu0 0
        %607 = vmatpush1.bf16.xpose.msra.mxu0 0
        %608 = vmatprep.subr.bf16.mxu0 0
        %609 = vmatpush1.bf16.xpose.msra.mxu0 0
        %610 = vmatprep.subr.bf16.mxu0 0
        %611 = vmatpush1.bf16.xpose.msra.mxu0 0
        %612 = vmatprep.subr.bf16.mxu0 0
        %613 = vmatpush1.bf16.xpose.msra.mxu0 %v596
        %614 = vmatprep.subr.bf16.mxu0 0
        %615 = vmatpush2.bf16.xpose.msra.mxu0 0
        %616 = vmatprep.subr.bf16.mxu0 0
        %617 = vmatpush2.bf16.xpose.msra.mxu0 0
        %618 = vmatprep.subr.bf16.mxu0 0
        %619 = vmatpush2.bf16.xpose.msra.mxu0 0
        %620 = vmatprep.subr.bf16.mxu0 0
        %621 = vmatpush2.bf16.xpose.msra.mxu0 0
        %622 = vmatprep.subr.bf16.mxu0 0
        %623 = vmatpush2.bf16.xpose.msra.mxu0 0
        %624 = vmatprep.subr.bf16.mxu0 0
        %625 = vmatpush2.bf16.xpose.msra.mxu0 0
        %626 = vmatprep.subr.bf16.mxu0 0
        %627 = vmatpush2.bf16.xpose.msra.mxu0 0
        %628 = vmatprep.subr.bf16.mxu0 0
        %629 = vmatpush2.bf16.xpose.msra.mxu0 0
        %630 = vmatprep.mubr.bf16.mxu0 0
        %631 = vmatmul.mubr.bf16.gmra.mxu0 %v593
        %v632 = vpop.f32.mrf.mxu0
        %v633 = vadd.f32 0.0, %v632
        %v634 = vpop.f32.mrf.mxu0
        %v635 = vpop.f32.mrf.mxu0
        %v636 = vadd.f32 0.0, %v635
        %v637 = vpop.f32.mrf.mxu0
        %638 = vdwg.mxu0
        %vm639 = vcmask 130048
        %v640 = vsel %vm639, %v633, -inf
        %641 = vmax.xlane.f32.xlu0 %v640
        %v642 = vpop.xlane.xlu0 %641
        %v643 = vsel %vm639, %v636, -inf
        %644 = vmax.xlane.f32.xlu0 %v643
        %v645 = vpop.xlane.xlu0 %644
        %v646 = vsub.f32 %v633, %v642
        %v647 = vsub.f32 %v636, %v645
        %v648 = vmul.f32 %v646, 1.442695
        %v649 = vpow.pop %v648
        %v650 = vmul.f32 %v647, 1.442695
        %v651 = vpow.pop %v650
        %v652 = vsel %vm639, %v649, 0.0
        %653 = vadd.xlane.f32.xlu0 %v652
        %v654 = vpop.xlane.xlu0 %653
        %v655 = vsel %vm639, %v651, 0.0
        %656 = vadd.xlane.f32.xlu0 %v655
        %v657 = vpop.xlane.xlu0 %656
        %v658 = vrcp.pop %v654
        %v659 = vrcp.pop %v657
        %v660 = vmul.f32 %v649, %v658
        %v661 = vmul.f32 %v651, %v659
        %v662 = vpack.c.bf16 %v661, %v660
        %v663 = vpack.c.bf16 %v585, %v581
        %v665 = vsel %vm639, %v662, 0
        %667 = vmatprep.subr.bf16.mxu0 0
        %668 = vmatpush1.bf16.msra.mxu0 0
        %669 = vmatprep.subr.bf16.mxu0 0
        %670 = vmatpush1.bf16.msra.mxu0 0
        %671 = vmatprep.subr.bf16.mxu0 0
        %672 = vmatpush1.bf16.msra.mxu0 0
        %673 = vmatprep.subr.bf16.mxu0 0
        %674 = vmatpush1.bf16.msra.mxu0 0
        %675 = vmatprep.subr.bf16.mxu0 0
        %676 = vmatpush1.bf16.msra.mxu0 0
        %677 = vmatprep.subr.bf16.mxu0 0
        %678 = vmatpush1.bf16.msra.mxu0 0
        %679 = vmatprep.subr.bf16.mxu0 0
        %680 = vmatpush1.bf16.msra.mxu0 0
        %681 = vmatprep.subr.bf16.mxu0 0
        %682 = vmatpush1.bf16.msra.mxu0 %v663
        %683 = vmatprep.subr.bf16.mxu0 0
        %684 = vmatpush2.bf16.msra.mxu0 0
        %685 = vmatprep.subr.bf16.mxu0 0
        %686 = vmatpush2.bf16.msra.mxu0 0
        %687 = vmatprep.subr.bf16.mxu0 0
        %688 = vmatpush2.bf16.msra.mxu0 0
        %689 = vmatprep.subr.bf16.mxu0 0
        %690 = vmatpush2.bf16.msra.mxu0 0
        %691 = vmatprep.subr.bf16.mxu0 0
        %692 = vmatpush2.bf16.msra.mxu0 0
        %693 = vmatprep.subr.bf16.mxu0 0
        %694 = vmatpush2.bf16.msra.mxu0 0
        %695 = vmatprep.subr.bf16.mxu0 0
        %696 = vmatpush2.bf16.msra.mxu0 0
        %697 = vmatprep.subr.bf16.mxu0 0
        %698 = vmatpush2.bf16.msra.mxu0 0
        %699 = vmatprep.mubr.bf16.mxu0 0
        %700 = vmatmul.mubr.bf16.gmra.mxu0 %v665
        %v701 = vpop.f32.mrf.mxu0
        %v702 = vadd.f32 0.0, %v701
        %v703 = vpop.f32.mrf.mxu0
        %v704 = vpop.f32.mrf.mxu0
        %v705 = vadd.f32 0.0, %v704
        %v706 = vpop.f32.mrf.mxu0
        %707 = vdwg.mxu0
        %708 = vrot.lane.b32.xlu0 %v587, 120
        %v709 = vpop.permute.xlu0 %708
        %710 = vrot.lane.b32.xlu0 %v587, 56
        %v711 = vpop.permute.xlu0 %710
        %v713 = vsel %vm591, %v709, 0
        %v716 = vsel %vm591, %v711, 0
        %718 = vmatprep.subr.bf16.mxu0 0
        %719 = vmatpush1.bf16.xpose.msra.mxu0 0
        %720 = vmatprep.subr.bf16.mxu0 0
        %721 = vmatpush1.bf16.xpose.msra.mxu0 0
        %722 = vmatprep.subr.bf16.mxu0 0
        %723 = vmatpush1.bf16.xpose.msra.mxu0 0
        %724 = vmatprep.subr.bf16.mxu0 0
        %725 = vmatpush1.bf16.xpose.msra.mxu0 0
        %726 = vmatprep.subr.bf16.mxu0 0
        %727 = vmatpush1.bf16.xpose.msra.mxu0 0
        %728 = vmatprep.subr.bf16.mxu0 0
        %729 = vmatpush1.bf16.xpose.msra.mxu0 0
        %730 = vmatprep.subr.bf16.mxu0 0
        %731 = vmatpush1.bf16.xpose.msra.mxu0 0
        %732 = vmatprep.subr.bf16.mxu0 0
        %733 = vmatpush1.bf16.xpose.msra.mxu0 %v716
        %734 = vmatprep.subr.bf16.mxu0 0
        %735 = vmatpush2.bf16.xpose.msra.mxu0 0
        %736 = vmatprep.subr.bf16.mxu0 0
        %737 = vmatpush2.bf16.xpose.msra.mxu0 0
        %738 = vmatprep.subr.bf16.mxu0 0
        %739 = vmatpush2.bf16.xpose.msra.mxu0 0
        %740 = vmatprep.subr.bf16.mxu0 0
        %741 = vmatpush2.bf16.xpose.msra.mxu0 0
        %742 = vmatprep.subr.bf16.mxu0 0
        %743 = vmatpush2.bf16.xpose.msra.mxu0 0
        %744 = vmatprep.subr.bf16.mxu0 0
        %745 = vmatpush2.bf16.xpose.msra.mxu0 0
        %746 = vmatprep.subr.bf16.mxu0 0
        %747 = vmatpush2.bf16.xpose.msra.mxu0 0
        %748 = vmatprep.subr.bf16.mxu0 0
        %749 = vmatpush2.bf16.xpose.msra.mxu0 0
        %750 = vmatprep.mubr.bf16.mxu0 0
        %751 = vmatmul.mubr.bf16.gmra.mxu0 %v713
        %v752 = vpop.f32.mrf.mxu0
        %v753 = vadd.f32 0.0, %v752
        %v754 = vpop.f32.mrf.mxu0
        %v755 = vpop.f32.mrf.mxu0
        %v756 = vadd.f32 0.0, %v755
        %v757 = vpop.f32.mrf.mxu0
        %758 = vdwg.mxu0
        %v759 = vsel %vm639, %v753, -inf
        %760 = vmax.xlane.f32.xlu0 %v759
        %v761 = vpop.xlane.xlu0 %760
        %v762 = vsel %vm639, %v756, -inf
        %763 = vmax.xlane.f32.xlu0 %v762
        %v764 = vpop.xlane.xlu0 %763
        %v765 = vsub.f32 %v753, %v761
        %v766 = vsub.f32 %v756, %v764
        %v767 = vmul.f32 %v765, 1.442695
        %v768 = vpow.pop %v767
        %v769 = vmul.f32 %v766, 1.442695
        %v770 = vpow.pop %v769
        %v771 = vsel %vm639, %v768, 0.0
        %772 = vadd.xlane.f32.xlu0 %v771
        %v773 = vpop.xlane.xlu0 %772
        %v774 = vsel %vm639, %v770, 0.0
        %775 = vadd.xlane.f32.xlu0 %v774
        %v776 = vpop.xlane.xlu0 %775
        %v777 = vrcp.pop %v773
        %v778 = vrcp.pop %v776
        %v779 = vmul.f32 %v768, %v777
        %v780 = vmul.f32 %v770, %v778
        %v781 = vpack.c.bf16 %v780, %v779
        %783 = vrot.lane.b32.xlu0 %v663, 120
        %v784 = vpop.permute.xlu0 %783
        %v787 = vsel %vm639, %v781, 0
        %789 = vmatprep.subr.bf16.mxu0 0
        %790 = vmatpush1.bf16.msra.mxu0 0
        %791 = vmatprep.subr.bf16.mxu0 0
        %792 = vmatpush1.bf16.msra.mxu0 0
        %793 = vmatprep.subr.bf16.mxu0 0
        %794 = vmatpush1.bf16.msra.mxu0 0
        %795 = vmatprep.subr.bf16.mxu0 0
        %796 = vmatpush1.bf16.msra.mxu0 0
        %797 = vmatprep.subr.bf16.mxu0 0
        %798 = vmatpush1.bf16.msra.mxu0 0
        %799 = vmatprep.subr.bf16.mxu0 0
        %800 = vmatpush1.bf16.msra.mxu0 0
        %801 = vmatprep.subr.bf16.mxu0 0
        %802 = vmatpush1.bf16.msra.mxu0 0
        %803 = vmatprep.subr.bf16.mxu0 0
        %804 = vmatpush1.bf16.msra.mxu0 %v784
        %805 = vmatprep.subr.bf16.mxu0 0
        %806 = vmatpush2.bf16.msra.mxu0 0
        %807 = vmatprep.subr.bf16.mxu0 0
        %808 = vmatpush2.bf16.msra.mxu0 0
        %809 = vmatprep.subr.bf16.mxu0 0
        %810 = vmatpush2.bf16.msra.mxu0 0
        %811 = vmatprep.subr.bf16.mxu0 0
        %812 = vmatpush2.bf16.msra.mxu0 0
        %813 = vmatprep.subr.bf16.mxu0 0
        %814 = vmatpush2.bf16.msra.mxu0 0
        %815 = vmatprep.subr.bf16.mxu0 0
        %816 = vmatpush2.bf16.msra.mxu0 0
        %817 = vmatprep.subr.bf16.mxu0 0
        %818 = vmatpush2.bf16.msra.mxu0 0
        %819 = vmatprep.subr.bf16.mxu0 0
        %820 = vmatpush2.bf16.msra.mxu0 0
        %821 = vmatprep.mubr.bf16.mxu0 0
        %822 = vmatmul.mubr.bf16.gmra.mxu0 %v787
        %v823 = vpop.f32.mrf.mxu0
        %v824 = vadd.f32 0.0, %v823
        %v825 = vpop.f32.mrf.mxu0
        %v826 = vpop.f32.mrf.mxu0
        %v827 = vadd.f32 0.0, %v826
        %v828 = vpop.f32.mrf.mxu0
        %829 = vdwg.mxu0
        %830 = vrot.lane.b32.xlu0 %v587, 112
        %v831 = vpop.permute.xlu0 %830
        %832 = vrot.lane.b32.xlu0 %v587, 48
        %v833 = vpop.permute.xlu0 %832
        %v835 = vsel %vm591, %v831, 0
        %v838 = vsel %vm591, %v833, 0
        %840 = vmatprep.subr.bf16.mxu0 0
        %841 = vmatpush1.bf16.xpose.msra.mxu0 0
        %842 = vmatprep.subr.bf16.mxu0 0
        %843 = vmatpush1.bf16.xpose.msra.mxu0 0
        %844 = vmatprep.subr.bf16.mxu0 0
        %845 = vmatpush1.bf16.xpose.msra.mxu0 0
        %846 = vmatprep.subr.bf16.mxu0 0
        %847 = vmatpush1.bf16.xpose.msra.mxu0 0
        %848 = vmatprep.subr.bf16.mxu0 0
        %849 = vmatpush1.bf16.xpose.msra.mxu0 0
        %850 = vmatprep.subr.bf16.mxu0 0
        %851 = vmatpush1.bf16.xpose.msra.mxu0 0
        %852 = vmatprep.subr.bf16.mxu0 0
        %853 = vmatpush1.bf16.xpose.msra.mxu0 0
        %854 = vmatprep.subr.bf16.mxu0 0
        %855 = vmatpush1.bf16.xpose.msra.mxu0 %v838
        %856 = vmatprep.subr.bf16.mxu0 0
        %857 = vmatpush2.bf16.xpose.msra.mxu0 0
        %858 = vmatprep.subr.bf16.mxu0 0
        %859 = vmatpush2.bf16.xpose.msra.mxu0 0
        %860 = vmatprep.subr.bf16.mxu0 0
        %861 = vmatpush2.bf16.xpose.msra.mxu0 0
        %862 = vmatprep.subr.bf16.mxu0 0
        %863 = vmatpush2.bf16.xpose.msra.mxu0 0
        %864 = vmatprep.subr.bf16.mxu0 0
        %865 = vmatpush2.bf16.xpose.msra.mxu0 0
        %866 = vmatprep.subr.bf16.mxu0 0
        %867 = vmatpush2.bf16.xpose.msra.mxu0 0
        %868 = vmatprep.subr.bf16.mxu0 0
        %869 = vmatpush2.bf16.xpose.msra.mxu0 0
        %870 = vmatprep.subr.bf16.mxu0 0
        %871 = vmatpush2.bf16.xpose.msra.mxu0 0
        %872 = vmatprep.mubr.bf16.mxu0 0
        %873 = vmatmul.mubr.bf16.gmra.mxu0 %v835
        %v874 = vpop.f32.mrf.mxu0
        %v875 = vadd.f32 0.0, %v874
        %v876 = vpop.f32.mrf.mxu0
        %v877 = vpop.f32.mrf.mxu0
        %v878 = vadd.f32 0.0, %v877
        %v879 = vpop.f32.mrf.mxu0
        %880 = vdwg.mxu0
        %v881 = vsel %vm639, %v875, -inf
        %882 = vmax.xlane.f32.xlu0 %v881
        %v883 = vpop.xlane.xlu0 %882
        %v884 = vsel %vm639, %v878, -inf
        %885 = vmax.xlane.f32.xlu0 %v884
        %v886 = vpop.xlane.xlu0 %885
        %v887 = vsub.f32 %v875, %v883
        %v888 = vsub.f32 %v878, %v886
        %v889 = vmul.f32 %v887, 1.442695
        %v890 = vpow.pop %v889
        %v891 = vmul.f32 %v888, 1.442695
        %v892 = vpow.pop %v891
        %v893 = vsel %vm639, %v890, 0.0
        %894 = vadd.xlane.f32.xlu0 %v893
        %v895 = vpop.xlane.xlu0 %894
        %v896 = vsel %vm639, %v892, 0.0
        %897 = vadd.xlane.f32.xlu0 %v896
        %v898 = vpop.xlane.xlu0 %897
        %v899 = vrcp.pop %v895
        %v900 = vrcp.pop %v898
        %v901 = vmul.f32 %v890, %v899
        %v902 = vmul.f32 %v892, %v900
        %v903 = vpack.c.bf16 %v902, %v901
        %904 = vrot.lane.b32.xlu0 %v663, 112
        %v905 = vpop.permute.xlu0 %904
        %v908 = vsel %vm639, %v903, 0
        %910 = vmatprep.subr.bf16.mxu0 0
        %911 = vmatpush1.bf16.msra.mxu0 0
        %912 = vmatprep.subr.bf16.mxu0 0
        %913 = vmatpush1.bf16.msra.mxu0 0
        %914 = vmatprep.subr.bf16.mxu0 0
        %915 = vmatpush1.bf16.msra.mxu0 0
        %916 = vmatprep.subr.bf16.mxu0 0
        %917 = vmatpush1.bf16.msra.mxu0 0
        %918 = vmatprep.subr.bf16.mxu0 0
        %919 = vmatpush1.bf16.msra.mxu0 0
        %920 = vmatprep.subr.bf16.mxu0 0
        %921 = vmatpush1.bf16.msra.mxu0 0
        %922 = vmatprep.subr.bf16.mxu0 0
        %923 = vmatpush1.bf16.msra.mxu0 0
        %924 = vmatprep.subr.bf16.mxu0 0
        %925 = vmatpush1.bf16.msra.mxu0 %v905
        %926 = vmatprep.subr.bf16.mxu0 0
        %927 = vmatpush2.bf16.msra.mxu0 0
        %928 = vmatprep.subr.bf16.mxu0 0
        %929 = vmatpush2.bf16.msra.mxu0 0
        %930 = vmatprep.subr.bf16.mxu0 0
        %931 = vmatpush2.bf16.msra.mxu0 0
        %932 = vmatprep.subr.bf16.mxu0 0
        %933 = vmatpush2.bf16.msra.mxu0 0
        %934 = vmatprep.subr.bf16.mxu0 0
        %935 = vmatpush2.bf16.msra.mxu0 0
        %936 = vmatprep.subr.bf16.mxu0 0
        %937 = vmatpush2.bf16.msra.mxu0 0
        %938 = vmatprep.subr.bf16.mxu0 0
        %939 = vmatpush2.bf16.msra.mxu0 0
        %940 = vmatprep.subr.bf16.mxu0 0
        %941 = vmatpush2.bf16.msra.mxu0 0
        %942 = vmatprep.mubr.bf16.mxu0 0
        %943 = vmatmul.mubr.bf16.gmra.mxu0 %v908
        %v944 = vpop.f32.mrf.mxu0
        %v945 = vadd.f32 0.0, %v944
        %v946 = vpop.f32.mrf.mxu0
        %v947 = vpop.f32.mrf.mxu0
        %v948 = vadd.f32 0.0, %v947
        %v949 = vpop.f32.mrf.mxu0
        %950 = vdwg.mxu0
        %951 = vrot.lane.b32.xlu0 %v587, 104
        %v952 = vpop.permute.xlu0 %951
        %953 = vrot.lane.b32.xlu0 %v587, 40
        %v954 = vpop.permute.xlu0 %953
        %v956 = vsel %vm591, %v952, 0
        %v959 = vsel %vm591, %v954, 0
        %961 = vmatprep.subr.bf16.mxu0 0
        %962 = vmatpush1.bf16.xpose.msra.mxu0 0
        %963 = vmatprep.subr.bf16.mxu0 0
        %964 = vmatpush1.bf16.xpose.msra.mxu0 0
        %965 = vmatprep.subr.bf16.mxu0 0
        %966 = vmatpush1.bf16.xpose.msra.mxu0 0
        %967 = vmatprep.subr.bf16.mxu0 0
        %968 = vmatpush1.bf16.xpose.msra.mxu0 0
        %969 = vmatprep.subr.bf16.mxu0 0
        %970 = vmatpush1.bf16.xpose.msra.mxu0 0
        %971 = vmatprep.subr.bf16.mxu0 0
        %972 = vmatpush1.bf16.xpose.msra.mxu0 0
        %973 = vmatprep.subr.bf16.mxu0 0
        %974 = vmatpush1.bf16.xpose.msra.mxu0 0
        %975 = vmatprep.subr.bf16.mxu0 0
        %976 = vmatpush1.bf16.xpose.msra.mxu0 %v959
        %977 = vmatprep.subr.bf16.mxu0 0
        %978 = vmatpush2.bf16.xpose.msra.mxu0 0
        %979 = vmatprep.subr.bf16.mxu0 0
        %980 = vmatpush2.bf16.xpose.msra.mxu0 0
        %981 = vmatprep.subr.bf16.mxu0 0
        %982 = vmatpush2.bf16.xpose.msra.mxu0 0
        %983 = vmatprep.subr.bf16.mxu0 0
        %984 = vmatpush2.bf16.xpose.msra.mxu0 0
        %985 = vmatprep.subr.bf16.mxu0 0
        %986 = vmatpush2.bf16.xpose.msra.mxu0 0
        %987 = vmatprep.subr.bf16.mxu0 0
        %988 = vmatpush2.bf16.xpose.msra.mxu0 0
        %989 = vmatprep.subr.bf16.mxu0 0
        %990 = vmatpush2.bf16.xpose.msra.mxu0 0
        %991 = vmatprep.subr.bf16.mxu0 0
        %992 = vmatpush2.bf16.xpose.msra.mxu0 0
        %993 = vmatprep.mubr.bf16.mxu0 0
        %994 = vmatmul.mubr.bf16.gmra.mxu0 %v956
        %v995 = vpop.f32.mrf.mxu0
        %v996 = vadd.f32 0.0, %v995
        %v997 = vpop.f32.mrf.mxu0
        %v998 = vpop.f32.mrf.mxu0
        %v999 = vadd.f32 0.0, %v998
        %v1000 = vpop.f32.mrf.mxu0
        %1001 = vdwg.mxu0
        %v1002 = vsel %vm639, %v996, -inf
        %1003 = vmax.xlane.f32.xlu0 %v1002
        %v1004 = vpop.xlane.xlu0 %1003
        %v1005 = vsel %vm639, %v999, -inf
        %1006 = vmax.xlane.f32.xlu0 %v1005
        %v1007 = vpop.xlane.xlu0 %1006
        %v1008 = vsub.f32 %v996, %v1004
        %v1009 = vsub.f32 %v999, %v1007
        %v1010 = vmul.f32 %v1008, 1.442695
        %v1011 = vpow.pop %v1010
        %v1012 = vmul.f32 %v1009, 1.442695
        %v1013 = vpow.pop %v1012
        %v1014 = vsel %vm639, %v1011, 0.0
        %1015 = vadd.xlane.f32.xlu0 %v1014
        %v1016 = vpop.xlane.xlu0 %1015
        %v1017 = vsel %vm639, %v1013, 0.0
        %1018 = vadd.xlane.f32.xlu0 %v1017
        %v1019 = vpop.xlane.xlu0 %1018
        %v1020 = vrcp.pop %v1016
        %v1021 = vrcp.pop %v1019
        %v1022 = vmul.f32 %v1011, %v1020
        %v1023 = vmul.f32 %v1013, %v1021
        %v1024 = vpack.c.bf16 %v1023, %v1022
        %1025 = vrot.lane.b32.xlu0 %v663, 104
        %v1026 = vpop.permute.xlu0 %1025
        %v1029 = vsel %vm639, %v1024, 0
        %1031 = vmatprep.subr.bf16.mxu0 0
        %1032 = vmatpush1.bf16.msra.mxu0 0
        %1033 = vmatprep.subr.bf16.mxu0 0
        %1034 = vmatpush1.bf16.msra.mxu0 0
        %1035 = vmatprep.subr.bf16.mxu0 0
        %1036 = vmatpush1.bf16.msra.mxu0 0
        %1037 = vmatprep.subr.bf16.mxu0 0
        %1038 = vmatpush1.bf16.msra.mxu0 0
        %1039 = vmatprep.subr.bf16.mxu0 0
        %1040 = vmatpush1.bf16.msra.mxu0 0
        %1041 = vmatprep.subr.bf16.mxu0 0
        %1042 = vmatpush1.bf16.msra.mxu0 0
        %1043 = vmatprep.subr.bf16.mxu0 0
        %1044 = vmatpush1.bf16.msra.mxu0 0
        %1045 = vmatprep.subr.bf16.mxu0 0
        %1046 = vmatpush1.bf16.msra.mxu0 %v1026
        %1047 = vmatprep.subr.bf16.mxu0 0
        %1048 = vmatpush2.bf16.msra.mxu0 0
        %1049 = vmatprep.subr.bf16.mxu0 0
        %1050 = vmatpush2.bf16.msra.mxu0 0
        %1051 = vmatprep.subr.bf16.mxu0 0
        %1052 = vmatpush2.bf16.msra.mxu0 0
        %1053 = vmatprep.subr.bf16.mxu0 0
        %1054 = vmatpush2.bf16.msra.mxu0 0
        %1055 = vmatprep.subr.bf16.mxu0 0
        %1056 = vmatpush2.bf16.msra.mxu0 0
        %1057 = vmatprep.subr.bf16.mxu0 0
        %1058 = vmatpush2.bf16.msra.mxu0 0
        %1059 = vmatprep.subr.bf16.mxu0 0
        %1060 = vmatpush2.bf16.msra.mxu0 0
        %1061 = vmatprep.subr.bf16.mxu0 0
        %1062 = vmatpush2.bf16.msra.mxu0 0
        %1063 = vmatprep.mubr.bf16.mxu0 0
        %1064 = vmatmul.mubr.bf16.gmra.mxu0 %v1029
        %v1065 = vpop.f32.mrf.mxu0
        %v1066 = vadd.f32 0.0, %v1065
        %v1067 = vpop.f32.mrf.mxu0
        %v1068 = vpop.f32.mrf.mxu0
        %v1069 = vadd.f32 0.0, %v1068
        %v1070 = vpop.f32.mrf.mxu0
        %1071 = vdwg.mxu0
        %1072 = vrot.lane.b32.xlu0 %v587, 96
        %v1073 = vpop.permute.xlu0 %1072
        %1074 = vrot.lane.b32.xlu0 %v587, 32
        %v1075 = vpop.permute.xlu0 %1074
        %v1077 = vsel %vm591, %v1073, 0
        %v1080 = vsel %vm591, %v1075, 0
        %1082 = vmatprep.subr.bf16.mxu0 0
        %1083 = vmatpush1.bf16.xpose.msra.mxu0 0
        %1084 = vmatprep.subr.bf16.mxu0 0
        %1085 = vmatpush1.bf16.xpose.msra.mxu0 0
        %1086 = vmatprep.subr.bf16.mxu0 0
        %1087 = vmatpush1.bf16.xpose.msra.mxu0 0
        %1088 = vmatprep.subr.bf16.mxu0 0
        %1089 = vmatpush1.bf16.xpose.msra.mxu0 0
        %1090 = vmatprep.subr.bf16.mxu0 0
        %1091 = vmatpush1.bf16.xpose.msra.mxu0 0
        %1092 = vmatprep.subr.bf16.mxu0 0
        %1093 = vmatpush1.bf16.xpose.msra.mxu0 0
        %1094 = vmatprep.subr.bf16.mxu0 0
        %1095 = vmatpush1.bf16.xpose.msra.mxu0 0
        %1096 = vmatprep.subr.bf16.mxu0 0
        %1097 = vmatpush1.bf16.xpose.msra.mxu0 %v1080
        %1098 = vmatprep.subr.bf16.mxu0 0
        %1099 = vmatpush2.bf16.xpose.msra.mxu0 0
        %1100 = vmatprep.subr.bf16.mxu0 0
        %1101 = vmatpush2.bf16.xpose.msra.mxu0 0
        %1102 = vmatprep.subr.bf16.mxu0 0
        %1103 = vmatpush2.bf16.xpose.msra.mxu0 0
        %1104 = vmatprep.subr.bf16.mxu0 0
        %1105 = vmatpush2.bf16.xpose.msra.mxu0 0
        %1106 = vmatprep.subr.bf16.mxu0 0
        %1107 = vmatpush2.bf16.xpose.msra.mxu0 0
        %1108 = vmatprep.subr.bf16.mxu0 0
        %1109 = vmatpush2.bf16.xpose.msra.mxu0 0
        %1110 = vmatprep.subr.bf16.mxu0 0
        %1111 = vmatpush2.bf16.xpose.msra.mxu0 0
        %1112 = vmatprep.subr.bf16.mxu0 0
        %1113 = vmatpush2.bf16.xpose.msra.mxu0 0
        %1114 = vmatprep.mubr.bf16.mxu0 0
        %1115 = vmatmul.mubr.bf16.gmra.mxu0 %v1077
        %v1116 = vpop.f32.mrf.mxu0
        %v1117 = vadd.f32 0.0, %v1116
        %v1118 = vpop.f32.mrf.mxu0
        %v1119 = vpop.f32.mrf.mxu0
        %v1120 = vadd.f32 0.0, %v1119
        %v1121 = vpop.f32.mrf.mxu0
        %1122 = vdwg.mxu0
        %v1123 = vsel %vm639, %v1117, -inf
        %1124 = vmax.xlane.f32.xlu0 %v1123
        %v1125 = vpop.xlane.xlu0 %1124
        %v1126 = vsel %vm639, %v1120, -inf
        %1127 = vmax.xlane.f32.xlu0 %v1126
        %v1128 = vpop.xlane.xlu0 %1127
        %v1129 = vsub.f32 %v1117, %v1125
        %v1130 = vsub.f32 %v1120, %v1128
        %v1131 = vmul.f32 %v1129, 1.442695
        %v1132 = vpow.pop %v1131
        %v1133 = vmul.f32 %v1130, 1.442695
        %v1134 = vpow.pop %v1133
        %v1135 = vsel %vm639, %v1132, 0.0
        %1136 = vadd.xlane.f32.xlu0 %v1135
        %v1137 = vpop.xlane.xlu0 %1136
        %v1138 = vsel %vm639, %v1134, 0.0
        %1139 = vadd.xlane.f32.xlu0 %v1138
        %v1140 = vpop.xlane.xlu0 %1139
        %v1141 = vrcp.pop %v1137
        %v1142 = vrcp.pop %v1140
        %v1143 = vmul.f32 %v1132, %v1141
        %v1144 = vmul.f32 %v1134, %v1142
        %v1145 = vpack.c.bf16 %v1144, %v1143
        %1146 = vrot.lane.b32.xlu0 %v663, 96
        %v1147 = vpop.permute.xlu0 %1146
        %v1150 = vsel %vm639, %v1145, 0
        %1152 = vmatprep.subr.bf16.mxu0 0
        %1153 = vmatpush1.bf16.msra.mxu0 0
        %1154 = vmatprep.subr.bf16.mxu0 0
        %1155 = vmatpush1.bf16.msra.mxu0 0
        %1156 = vmatprep.subr.bf16.mxu0 0
        %1157 = vmatpush1.bf16.msra.mxu0 0
        %1158 = vmatprep.subr.bf16.mxu0 0
        %1159 = vmatpush1.bf16.msra.mxu0 0
        %1160 = vmatprep.subr.bf16.mxu0 0
        %1161 = vmatpush1.bf16.msra.mxu0 0
        %1162 = vmatprep.subr.bf16.mxu0 0
        %1163 = vmatpush1.bf16.msra.mxu0 0
        %1164 = vmatprep.subr.bf16.mxu0 0
        %1165 = vmatpush1.bf16.msra.mxu0 0
        %1166 = vmatprep.subr.bf16.mxu0 0
        %1167 = vmatpush1.bf16.msra.mxu0 %v1147
        %1168 = vmatprep.subr.bf16.mxu0 0
        %1169 = vmatpush2.bf16.msra.mxu0 0
        %1170 = vmatprep.subr.bf16.mxu0 0
        %1171 = vmatpush2.bf16.msra.mxu0 0
        %1172 = vmatprep.subr.bf16.mxu0 0
        %1173 = vmatpush2.bf16.msra.mxu0 0
        %1174 = vmatprep.subr.bf16.mxu0 0
        %1175 = vmatpush2.bf16.msra.mxu0 0
        %1176 = vmatprep.subr.bf16.mxu0 0
        %1177 = vmatpush2.bf16.msra.mxu0 0
        %1178 = vmatprep.subr.bf16.mxu0 0
        %1179 = vmatpush2.bf16.msra.mxu0 0
        %1180 = vmatprep.subr.bf16.mxu0 0
        %1181 = vmatpush2.bf16.msra.mxu0 0
        %1182 = vmatprep.subr.bf16.mxu0 0
        %1183 = vmatpush2.bf16.msra.mxu0 0
        %1184 = vmatprep.mubr.bf16.mxu0 0
        %1185 = vmatmul.mubr.bf16.gmra.mxu0 %v1150
        %v1186 = vpop.f32.mrf.mxu0
        %v1187 = vadd.f32 0.0, %v1186
        %v1188 = vpop.f32.mrf.mxu0
        %v1189 = vpop.f32.mrf.mxu0
        %v1190 = vadd.f32 0.0, %v1189
        %v1191 = vpop.f32.mrf.mxu0
        %1192 = vdwg.mxu0
        %1193 = vrot.lane.b32.xlu0 %v587, 88
        %v1194 = vpop.permute.xlu0 %1193
        %1195 = vrot.lane.b32.xlu0 %v587, 24
        %v1196 = vpop.permute.xlu0 %1195
        %v1198 = vsel %vm591, %v1194, 0
        %v1201 = vsel %vm591, %v1196, 0
        %1203 = vmatprep.subr.bf16.mxu0 0
        %1204 = vmatpush1.bf16.xpose.msra.mxu0 0
        %1205 = vmatprep.subr.bf16.mxu0 0
        %1206 = vmatpush1.bf16.xpose.msra.mxu0 0
        %1207 = vmatprep.subr.bf16.mxu0 0
        %1208 = vmatpush1.bf16.xpose.msra.mxu0 0
        %1209 = vmatprep.subr.bf16.mxu0 0
        %1210 = vmatpush1.bf16.xpose.msra.mxu0 0
        %1211 = vmatprep.subr.bf16.mxu0 0
        %1212 = vmatpush1.bf16.xpose.msra.mxu0 0
        %1213 = vmatprep.subr.bf16.mxu0 0
        %1214 = vmatpush1.bf16.xpose.msra.mxu0 0
        %1215 = vmatprep.subr.bf16.mxu0 0
        %1216 = vmatpush1.bf16.xpose.msra.mxu0 0
        %1217 = vmatprep.subr.bf16.mxu0 0
        %1218 = vmatpush1.bf16.xpose.msra.mxu0 %v1201
        %1219 = vmatprep.subr.bf16.mxu0 0
        %1220 = vmatpush2.bf16.xpose.msra.mxu0 0
        %1221 = vmatprep.subr.bf16.mxu0 0
        %1222 = vmatpush2.bf16.xpose.msra.mxu0 0
        %1223 = vmatprep.subr.bf16.mxu0 0
        %1224 = vmatpush2.bf16.xpose.msra.mxu0 0
        %1225 = vmatprep.subr.bf16.mxu0 0
        %1226 = vmatpush2.bf16.xpose.msra.mxu0 0
        %1227 = vmatprep.subr.bf16.mxu0 0
        %1228 = vmatpush2.bf16.xpose.msra.mxu0 0
        %1229 = vmatprep.subr.bf16.mxu0 0
        %1230 = vmatpush2.bf16.xpose.msra.mxu0 0
        %1231 = vmatprep.subr.bf16.mxu0 0
        %1232 = vmatpush2.bf16.xpose.msra.mxu0 0
        %1233 = vmatprep.subr.bf16.mxu0 0
        %1234 = vmatpush2.bf16.xpose.msra.mxu0 0
        %1235 = vmatprep.mubr.bf16.mxu0 0
        %1236 = vmatmul.mubr.bf16.gmra.mxu0 %v1198
        %v1237 = vpop.f32.mrf.mxu0
        %v1238 = vadd.f32 0.0, %v1237
        %v1239 = vpop.f32.mrf.mxu0
        %v1240 = vpop.f32.mrf.mxu0
        %v1241 = vadd.f32 0.0, %v1240
        %v1242 = vpop.f32.mrf.mxu0
        %1243 = vdwg.mxu0
        %v1244 = vsel %vm639, %v1238, -inf
        %1245 = vmax.xlane.f32.xlu0 %v1244
        %v1246 = vpop.xlane.xlu0 %1245
        %v1247 = vsel %vm639, %v1241, -inf
        %1248 = vmax.xlane.f32.xlu0 %v1247
        %v1249 = vpop.xlane.xlu0 %1248
        %v1250 = vsub.f32 %v1238, %v1246
        %v1251 = vsub.f32 %v1241, %v1249
        %v1252 = vmul.f32 %v1250, 1.442695
        %v1253 = vpow.pop %v1252
        %v1254 = vmul.f32 %v1251, 1.442695
        %v1255 = vpow.pop %v1254
        %v1256 = vsel %vm639, %v1253, 0.0
        %1257 = vadd.xlane.f32.xlu0 %v1256
        %v1258 = vpop.xlane.xlu0 %1257
        %v1259 = vsel %vm639, %v1255, 0.0
        %1260 = vadd.xlane.f32.xlu0 %v1259
        %v1261 = vpop.xlane.xlu0 %1260
        %v1262 = vrcp.pop %v1258
        %v1263 = vrcp.pop %v1261
        %v1264 = vmul.f32 %v1253, %v1262
        %v1265 = vmul.f32 %v1255, %v1263
        %v1266 = vpack.c.bf16 %v1265, %v1264
        %1267 = vrot.lane.b32.xlu0 %v663, 88
        %v1268 = vpop.permute.xlu0 %1267
        %v1271 = vsel %vm639, %v1266, 0
        %1273 = vmatprep.subr.bf16.mxu0 0
        %1274 = vmatpush1.bf16.msra.mxu0 0
        %1275 = vmatprep.subr.bf16.mxu0 0
        %1276 = vmatpush1.bf16.msra.mxu0 0
        %1277 = vmatprep.subr.bf16.mxu0 0
        %1278 = vmatpush1.bf16.msra.mxu0 0
        %1279 = vmatprep.subr.bf16.mxu0 0
        %1280 = vmatpush1.bf16.msra.mxu0 0
        %1281 = vmatprep.subr.bf16.mxu0 0
        %1282 = vmatpush1.bf16.msra.mxu0 0
        %1283 = vmatprep.subr.bf16.mxu0 0
        %1284 = vmatpush1.bf16.msra.mxu0 0
        %1285 = vmatprep.subr.bf16.mxu0 0
        %1286 = vmatpush1.bf16.msra.mxu0 0
        %1287 = vmatprep.subr.bf16.mxu0 0
        %1288 = vmatpush1.bf16.msra.mxu0 %v1268
        %1289 = vmatprep.subr.bf16.mxu0 0
        %1290 = vmatpush2.bf16.msra.mxu0 0
        %1291 = vmatprep.subr.bf16.mxu0 0
        %1292 = vmatpush2.bf16.msra.mxu0 0
        %1293 = vmatprep.subr.bf16.mxu0 0
        %1294 = vmatpush2.bf16.msra.mxu0 0
        %1295 = vmatprep.subr.bf16.mxu0 0
        %1296 = vmatpush2.bf16.msra.mxu0 0
        %1297 = vmatprep.subr.bf16.mxu0 0
        %1298 = vmatpush2.bf16.msra.mxu0 0
        %1299 = vmatprep.subr.bf16.mxu0 0
        %1300 = vmatpush2.bf16.msra.mxu0 0
        %1301 = vmatprep.subr.bf16.mxu0 0
        %1302 = vmatpush2.bf16.msra.mxu0 0
        %1303 = vmatprep.subr.bf16.mxu0 0
        %1304 = vmatpush2.bf16.msra.mxu0 0
        %1305 = vmatprep.mubr.bf16.mxu0 0
        %1306 = vmatmul.mubr.bf16.gmra.mxu0 %v1271
        %v1307 = vpop.f32.mrf.mxu0
        %v1308 = vadd.f32 0.0, %v1307
        %v1309 = vpop.f32.mrf.mxu0
        %v1310 = vpop.f32.mrf.mxu0
        %v1311 = vadd.f32 0.0, %v1310
        %v1312 = vpop.f32.mrf.mxu0
        %1313 = vdwg.mxu0
        %1314 = vrot.lane.b32.xlu0 %v587, 80
        %v1315 = vpop.permute.xlu0 %1314
        %1316 = vrot.lane.b32.xlu0 %v587, 16
        %v1317 = vpop.permute.xlu0 %1316
        %v1319 = vsel %vm591, %v1315, 0
        %v1322 = vsel %vm591, %v1317, 0
        %1324 = vmatprep.subr.bf16.mxu0 0
        %1325 = vmatpush1.bf16.xpose.msra.mxu0 0
        %1326 = vmatprep.subr.bf16.mxu0 0
        %1327 = vmatpush1.bf16.xpose.msra.mxu0 0
        %1328 = vmatprep.subr.bf16.mxu0 0
        %1329 = vmatpush1.bf16.xpose.msra.mxu0 0
        %1330 = vmatprep.subr.bf16.mxu0 0
        %1331 = vmatpush1.bf16.xpose.msra.mxu0 0
        %1332 = vmatprep.subr.bf16.mxu0 0
        %1333 = vmatpush1.bf16.xpose.msra.mxu0 0
        %1334 = vmatprep.subr.bf16.mxu0 0
        %1335 = vmatpush1.bf16.xpose.msra.mxu0 0
        %1336 = vmatprep.subr.bf16.mxu0 0
        %1337 = vmatpush1.bf16.xpose.msra.mxu0 0
        %1338 = vmatprep.subr.bf16.mxu0 0
        %1339 = vmatpush1.bf16.xpose.msra.mxu0 %v1322
        %1340 = vmatprep.subr.bf16.mxu0 0
        %1341 = vmatpush2.bf16.xpose.msra.mxu0 0
        %1342 = vmatprep.subr.bf16.mxu0 0
        %1343 = vmatpush2.bf16.xpose.msra.mxu0 0
        %1344 = vmatprep.subr.bf16.mxu0 0
        %1345 = vmatpush2.bf16.xpose.msra.mxu0 0
        %1346 = vmatprep.subr.bf16.mxu0 0
        %1347 = vmatpush2.bf16.xpose.msra.mxu0 0
        %1348 = vmatprep.subr.bf16.mxu0 0
        %1349 = vmatpush2.bf16.xpose.msra.mxu0 0
        %1350 = vmatprep.subr.bf16.mxu0 0
        %1351 = vmatpush2.bf16.xpose.msra.mxu0 0
        %1352 = vmatprep.subr.bf16.mxu0 0
        %1353 = vmatpush2.bf16.xpose.msra.mxu0 0
        %1354 = vmatprep.subr.bf16.mxu0 0
        %1355 = vmatpush2.bf16.xpose.msra.mxu0 0
        %1356 = vmatprep.mubr.bf16.mxu0 0
        %1357 = vmatmul.mubr.bf16.gmra.mxu0 %v1319
        %v1358 = vpop.f32.mrf.mxu0
        %v1359 = vadd.f32 0.0, %v1358
        %v1360 = vpop.f32.mrf.mxu0
        %v1361 = vpop.f32.mrf.mxu0
        %v1362 = vadd.f32 0.0, %v1361
        %v1363 = vpop.f32.mrf.mxu0
        %1364 = vdwg.mxu0
        %v1365 = vsel %vm639, %v1359, -inf
        %1366 = vmax.xlane.f32.xlu0 %v1365
        %v1367 = vpop.xlane.xlu0 %1366
        %v1368 = vsel %vm639, %v1362, -inf
        %1369 = vmax.xlane.f32.xlu0 %v1368
        %v1370 = vpop.xlane.xlu0 %1369
        %v1371 = vsub.f32 %v1359, %v1367
        %v1372 = vsub.f32 %v1362, %v1370
        %v1373 = vmul.f32 %v1371, 1.442695
        %v1374 = vpow.pop %v1373
        %v1375 = vmul.f32 %v1372, 1.442695
        %v1376 = vpow.pop %v1375
        %v1377 = vsel %vm639, %v1374, 0.0
        %1378 = vadd.xlane.f32.xlu0 %v1377
        %v1379 = vpop.xlane.xlu0 %1378
        %v1380 = vsel %vm639, %v1376, 0.0
        %1381 = vadd.xlane.f32.xlu0 %v1380
        %v1382 = vpop.xlane.xlu0 %1381
        %v1383 = vrcp.pop %v1379
        %v1384 = vrcp.pop %v1382
        %v1385 = vmul.f32 %v1374, %v1383
        %v1386 = vmul.f32 %v1376, %v1384
        %v1387 = vpack.c.bf16 %v1386, %v1385
        %1388 = vrot.lane.b32.xlu0 %v663, 80
        %v1389 = vpop.permute.xlu0 %1388
        %v1392 = vsel %vm639, %v1387, 0
        %1394 = vmatprep.subr.bf16.mxu0 0
        %1395 = vmatpush1.bf16.msra.mxu0 0
        %1396 = vmatprep.subr.bf16.mxu0 0
        %1397 = vmatpush1.bf16.msra.mxu0 0
        %1398 = vmatprep.subr.bf16.mxu0 0
        %1399 = vmatpush1.bf16.msra.mxu0 0
        %1400 = vmatprep.subr.bf16.mxu0 0
        %1401 = vmatpush1.bf16.msra.mxu0 0
        %1402 = vmatprep.subr.bf16.mxu0 0
        %1403 = vmatpush1.bf16.msra.mxu0 0
        %1404 = vmatprep.subr.bf16.mxu0 0
        %1405 = vmatpush1.bf16.msra.mxu0 0
        %1406 = vmatprep.subr.bf16.mxu0 0
        %1407 = vmatpush1.bf16.msra.mxu0 0
        %1408 = vmatprep.subr.bf16.mxu0 0
        %1409 = vmatpush1.bf16.msra.mxu0 %v1389
        %1410 = vmatprep.subr.bf16.mxu0 0
        %1411 = vmatpush2.bf16.msra.mxu0 0
        %1412 = vmatprep.subr.bf16.mxu0 0
        %1413 = vmatpush2.bf16.msra.mxu0 0
        %1414 = vmatprep.subr.bf16.mxu0 0
        %1415 = vmatpush2.bf16.msra.mxu0 0
        %1416 = vmatprep.subr.bf16.mxu0 0
        %1417 = vmatpush2.bf16.msra.mxu0 0
        %1418 = vmatprep.subr.bf16.mxu0 0
        %1419 = vmatpush2.bf16.msra.mxu0 0
        %1420 = vmatprep.subr.bf16.mxu0 0
        %1421 = vmatpush2.bf16.msra.mxu0 0
        %1422 = vmatprep.subr.bf16.mxu0 0
        %1423 = vmatpush2.bf16.msra.mxu0 0
        %1424 = vmatprep.subr.bf16.mxu0 0
        %1425 = vmatpush2.bf16.msra.mxu0 0
        %1426 = vmatprep.mubr.bf16.mxu0 0
        %1427 = vmatmul.mubr.bf16.gmra.mxu0 %v1392
        %v1428 = vpop.f32.mrf.mxu0
        %v1429 = vadd.f32 0.0, %v1428
        %v1430 = vpop.f32.mrf.mxu0
        %v1431 = vpop.f32.mrf.mxu0
        %v1432 = vadd.f32 0.0, %v1431
        %v1433 = vpop.f32.mrf.mxu0
        %1434 = vdwg.mxu0
        %1435 = vrot.lane.b32.xlu0 %v587, 72
        %v1436 = vpop.permute.xlu0 %1435
        %1437 = vrot.lane.b32.xlu0 %v587, 8
        %v1438 = vpop.permute.xlu0 %1437
        %v1440 = vsel %vm591, %v1436, 0
        %v1443 = vsel %vm591, %v1438, 0
        %1445 = vmatprep.subr.bf16.mxu0 0
        %1446 = vmatpush1.bf16.xpose.msra.mxu0 0
        %1447 = vmatprep.subr.bf16.mxu0 0
        %1448 = vmatpush1.bf16.xpose.msra.mxu0 0
        %1449 = vmatprep.subr.bf16.mxu0 0
        %1450 = vmatpush1.bf16.xpose.msra.mxu0 0
        %1451 = vmatprep.subr.bf16.mxu0 0
        %1452 = vmatpush1.bf16.xpose.msra.mxu0 0
        %1453 = vmatprep.subr.bf16.mxu0 0
        %1454 = vmatpush1.bf16.xpose.msra.mxu0 0
        %1455 = vmatprep.subr.bf16.mxu0 0
        %1456 = vmatpush1.bf16.xpose.msra.mxu0 0
        %1457 = vmatprep.subr.bf16.mxu0 0
        %1458 = vmatpush1.bf16.xpose.msra.mxu0 0
        %1459 = vmatprep.subr.bf16.mxu0 0
        %1460 = vmatpush1.bf16.xpose.msra.mxu0 %v1443
        %1461 = vmatprep.subr.bf16.mxu0 0
        %1462 = vmatpush2.bf16.xpose.msra.mxu0 0
        %1463 = vmatprep.subr.bf16.mxu0 0
        %1464 = vmatpush2.bf16.xpose.msra.mxu0 0
        %1465 = vmatprep.subr.bf16.mxu0 0
        %1466 = vmatpush2.bf16.xpose.msra.mxu0 0
        %1467 = vmatprep.subr.bf16.mxu0 0
        %1468 = vmatpush2.bf16.xpose.msra.mxu0 0
        %1469 = vmatprep.subr.bf16.mxu0 0
        %1470 = vmatpush2.bf16.xpose.msra.mxu0 0
        %1471 = vmatprep.subr.bf16.mxu0 0
        %1472 = vmatpush2.bf16.xpose.msra.mxu0 0
        %1473 = vmatprep.subr.bf16.mxu0 0
        %1474 = vmatpush2.bf16.xpose.msra.mxu0 0
        %1475 = vmatprep.subr.bf16.mxu0 0
        %1476 = vmatpush2.bf16.xpose.msra.mxu0 0
        %1477 = vmatprep.mubr.bf16.mxu0 0
        %1478 = vmatmul.mubr.bf16.gmra.mxu0 %v1440
        %v1479 = vpop.f32.mrf.mxu0
        %v1480 = vadd.f32 0.0, %v1479
        %v1481 = vpop.f32.mrf.mxu0
        %v1482 = vpop.f32.mrf.mxu0
        %v1483 = vadd.f32 0.0, %v1482
        %v1484 = vpop.f32.mrf.mxu0
        %1485 = vdwg.mxu0
        %v1486 = vsel %vm639, %v1480, -inf
        %1487 = vmax.xlane.f32.xlu0 %v1486
        %v1488 = vpop.xlane.xlu0 %1487
        %v1489 = vsel %vm639, %v1483, -inf
        %1490 = vmax.xlane.f32.xlu0 %v1489
        %v1491 = vpop.xlane.xlu0 %1490
        %v1492 = vsub.f32 %v1480, %v1488
        %v1493 = vsub.f32 %v1483, %v1491
        %v1494 = vmul.f32 %v1492, 1.442695
        %v1495 = vpow.pop %v1494
        %v1496 = vmul.f32 %v1493, 1.442695
        %v1497 = vpow.pop %v1496
        %v1498 = vsel %vm639, %v1495, 0.0
        %1499 = vadd.xlane.f32.xlu0 %v1498
        %v1500 = vpop.xlane.xlu0 %1499
        %v1501 = vsel %vm639, %v1497, 0.0
        %1502 = vadd.xlane.f32.xlu0 %v1501
        %v1503 = vpop.xlane.xlu0 %1502
        %v1504 = vrcp.pop %v1500
        %v1505 = vrcp.pop %v1503
        %v1506 = vmul.f32 %v1495, %v1504
        %v1507 = vmul.f32 %v1497, %v1505
        %v1508 = vpack.c.bf16 %v1507, %v1506
        %1509 = vrot.lane.b32.xlu0 %v663, 72
        %v1510 = vpop.permute.xlu0 %1509
        %v1513 = vsel %vm639, %v1508, 0
        %1515 = vmatprep.subr.bf16.mxu0 0
        %1516 = vmatpush1.bf16.msra.mxu0 0
        %1517 = vmatprep.subr.bf16.mxu0 0
        %1518 = vmatpush1.bf16.msra.mxu0 0
        %1519 = vmatprep.subr.bf16.mxu0 0
        %1520 = vmatpush1.bf16.msra.mxu0 0
        %1521 = vmatprep.subr.bf16.mxu0 0
        %1522 = vmatpush1.bf16.msra.mxu0 0
        %1523 = vmatprep.subr.bf16.mxu0 0
        %1524 = vmatpush1.bf16.msra.mxu0 0
        %1525 = vmatprep.subr.bf16.mxu0 0
        %1526 = vmatpush1.bf16.msra.mxu0 0
        %1527 = vmatprep.subr.bf16.mxu0 0
        %1528 = vmatpush1.bf16.msra.mxu0 0
        %1529 = vmatprep.subr.bf16.mxu0 0
        %1530 = vmatpush1.bf16.msra.mxu0 %v1510
        %1531 = vmatprep.subr.bf16.mxu0 0
        %1532 = vmatpush2.bf16.msra.mxu0 0
        %1533 = vmatprep.subr.bf16.mxu0 0
        %1534 = vmatpush2.bf16.msra.mxu0 0
        %1535 = vmatprep.subr.bf16.mxu0 0
        %1536 = vmatpush2.bf16.msra.mxu0 0
        %1537 = vmatprep.subr.bf16.mxu0 0
        %1538 = vmatpush2.bf16.msra.mxu0 0
        %1539 = vmatprep.subr.bf16.mxu0 0
        %1540 = vmatpush2.bf16.msra.mxu0 0
        %1541 = vmatprep.subr.bf16.mxu0 0
        %1542 = vmatpush2.bf16.msra.mxu0 0
        %1543 = vmatprep.subr.bf16.mxu0 0
        %1544 = vmatpush2.bf16.msra.mxu0 0
        %1545 = vmatprep.subr.bf16.mxu0 0
        %1546 = vmatpush2.bf16.msra.mxu0 0
        %1547 = vmatprep.mubr.bf16.mxu0 0
        %1548 = vmatmul.mubr.bf16.gmra.mxu0 %v1513
        %v1549 = vpop.f32.mrf.mxu0
        %v1550 = vadd.f32 0.0, %v1549
        %v1551 = vpop.f32.mrf.mxu0
        %v1552 = vpop.f32.mrf.mxu0
        %v1553 = vadd.f32 0.0, %v1552
        %v1554 = vpop.f32.mrf.mxu0
        %1555 = vdwg.mxu0
        %1558 = vrot.lane.b32.xlu0 %v824, 8
        %v1559 = vpop.permute.xlu0 %1558
        %1560 = vrot.lane.b32.xlu0 %v827, 8
        %v1561 = vpop.permute.xlu0 %1560
        %1566 = vrot.lane.b32.xlu0 %v945, 16
        %v1567 = vpop.permute.xlu0 %1566
        %1568 = vrot.lane.b32.xlu0 %v948, 16
        %v1569 = vpop.permute.xlu0 %1568
        %1574 = vrot.lane.b32.xlu0 %v1066, 24
        %v1575 = vpop.permute.xlu0 %1574
        %1576 = vrot.lane.b32.xlu0 %v1069, 24
        %v1577 = vpop.permute.xlu0 %1576
        %1582 = vrot.lane.b32.xlu0 %v1187, 32
        %v1583 = vpop.permute.xlu0 %1582
        %1584 = vrot.lane.b32.xlu0 %v1190, 32
        %v1585 = vpop.permute.xlu0 %1584
        %1590 = vrot.lane.b32.xlu0 %v1308, 40
        %v1591 = vpop.permute.xlu0 %1590
        %1592 = vrot.lane.b32.xlu0 %v1311, 40
        %v1593 = vpop.permute.xlu0 %1592
        %1598 = vrot.lane.b32.xlu0 %v1429, 48
        %v1599 = vpop.permute.xlu0 %1598
        %1600 = vrot.lane.b32.xlu0 %v1432, 48
        %v1601 = vpop.permute.xlu0 %1600
        %1606 = vrot.lane.b32.xlu0 %v1550, 56
        %v1607 = vpop.permute.xlu0 %1606
        %1608 = vrot.lane.b32.xlu0 %v1553, 56
        %v1609 = vpop.permute.xlu0 %1608
        %v1612 = vsel %vm591, %v702, %v1559
        %v1613 = vsel %vm591, %v705, %v1561
        %v1614 = vsel %vm639, %v1612, %v1567
        %v1615 = vsel %vm639, %v1613, %v1569
        %vm1616 = vcmask 195584
        %v1617 = vsel %vm1616, %v1614, %v1575
        %v1618 = vsel %vm1616, %v1615, %v1577
        %vm1619 = vcmask 261120
        %v1620 = vsel %vm1619, %v1617, %v1583
        %v1621 = vsel %vm1619, %v1618, %v1585
        %vm1622 = vcmask 326656
        %v1623 = vsel %vm1622, %v1620, %v1591
        %v1624 = vsel %vm1622, %v1621, %v1593
        %vm1625 = vcmask 392192
        %v1626 = vsel %vm1625, %v1623, %v1599
        %v1627 = vsel %vm1625, %v1624, %v1601
        %vm1628 = vcmask 457728
        %v1629 = vsel %vm1628, %v1626, %v1607
        %v1630 = vsel %vm1628, %v1627, %v1609
        %v1631 = vpack.c.bf16 %v1630, %v1629
        %v1632 = vld [vmem:[%s3] sm:$0xf]
        %v1633 = vld [vmem:[%s3 + $0x4] sm:$0xf]
        %v1634 = vld [vmem:[%s3 + $0x8] sm:$0xf]
        %v1635 = vld [vmem:[%s3 + $0xc] sm:$0xf]
        %v1636 = vld [vmem:[%s3 + $0x10] sm:$0xf]
        %v1637 = vld [vmem:[%s3 + $0x14] sm:$0xf]
        %v1638 = vld [vmem:[%s3 + $0x18] sm:$0xf]
        %v1639 = vld [vmem:[%s3 + $0x1c] sm:$0xf]
        %v1640 = vld [vmem:[%s4] sm:$0x1]
        %v1642 = vlaneseq
        %v1643 = vshrl.u32 %v1642, 7
        %v1644 = vsub.s32 0, %v1643
        %v1645 = vrot.slane %v1640, %v1644
        %v1655 = vunpack.c.l.b16 %v1632
        %v1656 = vunpack.c.l.b16 %v1633
        %v1657 = vunpack.c.l.b16 %v1634
        %v1658 = vunpack.c.l.b16 %v1635
        %v1659 = vunpack.c.l.b16 %v1636
        %v1660 = vunpack.c.l.b16 %v1637
        %v1661 = vunpack.c.l.b16 %v1638
        %v1662 = vunpack.c.l.b16 %v1639
        %v1663 = vpack.c.b16 %v1656, %v1655
        %v1664 = vpack.c.b16 %v1658, %v1657
        %v1665 = vpack.c.b16 %v1660, %v1659
        %v1666 = vpack.c.b16 %v1662, %v1661
        %v1672 = vsel %vm444, %v1631, 0
        %1674 = vmatprep.subr.bf16.mxu0 0
        %1675 = vmatpush1.bf16.msra.mxu0 0
        %1676 = vmatprep.subr.bf16.mxu0 0
        %1677 = vmatpush1.bf16.msra.mxu0 0
        %1678 = vmatprep.subr.bf16.mxu0 0
        %1679 = vmatpush1.bf16.msra.mxu0 0
        %1680 = vmatprep.subr.bf16.mxu0 0
        %1681 = vmatpush1.bf16.msra.mxu0 0
        %1682 = vmatprep.subr.bf16.mxu0 0
        %1683 = vmatpush1.bf16.msra.mxu0 %v1666
        %1684 = vmatprep.subr.bf16.mxu0 0
        %1685 = vmatpush1.bf16.msra.mxu0 %v1665
        %1686 = vmatprep.subr.bf16.mxu0 0
        %1687 = vmatpush1.bf16.msra.mxu0 %v1664
        %1688 = vmatprep.subr.bf16.mxu0 0
        %1689 = vmatpush1.bf16.msra.mxu0 %v1663
        %1690 = vmatprep.subr.bf16.mxu0 0
        %1691 = vmatpush2.bf16.msra.mxu0 0
        %1692 = vmatprep.subr.bf16.mxu0 0
        %1693 = vmatpush2.bf16.msra.mxu0 0
        %1694 = vmatprep.subr.bf16.mxu0 0
        %1695 = vmatpush2.bf16.msra.mxu0 0
        %1696 = vmatprep.subr.bf16.mxu0 0
        %1697 = vmatpush2.bf16.msra.mxu0 0
        %1698 = vmatprep.subr.bf16.mxu0 0
        %1699 = vmatpush2.bf16.msra.mxu0 0
        %1700 = vmatprep.subr.bf16.mxu0 0
        %1701 = vmatpush2.bf16.msra.mxu0 0
        %1702 = vmatprep.subr.bf16.mxu0 0
        %1703 = vmatpush2.bf16.msra.mxu0 0
        %1704 = vmatprep.subr.bf16.mxu0 0
        %1705 = vmatpush2.bf16.msra.mxu0 0
        %1706 = vmatprep.mubr.bf16.mxu0 0
        %1707 = vmatmul.mubr.bf16.gmra.mxu0 %v1672
        %v1708 = vpop.f32.mrf.mxu0
        %v1709 = vadd.f32 %v1645, %v1708
        %v1710 = vpop.f32.mrf.mxu0
        %v1711 = vpop.f32.mrf.mxu0
        %v1712 = vadd.f32 %v1645, %v1711
        %v1713 = vpop.f32.mrf.mxu0
        %1714 = vdwg.mxu0
        %v1715 = vadd.f32 %v440, %v1709
        %v1716 = vadd.f32 %v441, %v1712
        %v1717 = vld [vmem:[%s7] sm:$0x1]
        %v1718 = vld [vmem:[%s8] sm:$0x1]
        %v1719 = vsel %vm444, %v1715, 0.0
        %1720 = vadd.xlane.f32.xlu0 %v1719
        %v1721 = vpop.xlane.xlu0 %1720
        %v1722 = vsel %vm444, %v1716, 0.0
        %1723 = vadd.xlane.f32.xlu0 %v1722
        %v1724 = vpop.xlane.xlu0 %1723
        %v1725 = vmul.f32 %v1721, %v451
        %v1726 = vmul.f32 %v1724, %v451
        %v1727 = vsub.f32 %v1715, %v1725
        %v1728 = vsub.f32 %v1716, %v1726
        %v1729 = vmul.f32 %v1727, %v1727
        %v1730 = vmul.f32 %v1728, %v1728
        %v1731 = vsel %vm444, %v1729, 0.0
        %1732 = vadd.xlane.f32.xlu0 %v1731
        %v1733 = vpop.xlane.xlu0 %1732
        %v1734 = vsel %vm444, %v1730, 0.0
        %1735 = vadd.xlane.f32.xlu0 %v1734
        %v1736 = vpop.xlane.xlu0 %1735
        %v1737 = vmul.f32 %v1733, %v451
        %v1738 = vmul.f32 %v1736, %v451
        %v1739 = vadd.f32 %v1737, 1e-05
        %v1740 = vadd.f32 %v1738, 1e-05
        %v1741 = vrsqrt.pop %v1739
        %v1742 = vrsqrt.pop %v1740
        %v1743 = vmul.f32 %v1727, %v1741
        %v1744 = vmul.f32 %v1728, %v1742
        %v1746 = vlaneseq
        %v1747 = vshrl.u32 %v1746, 7
        %v1748 = vsub.s32 0, %v1747
        %v1749 = vrot.slane %v1717, %v1748
        %v1751 = vmul.f32 %v1743, %v1749
        %v1752 = vmul.f32 %v1744, %v1749
        %v1754 = vlaneseq
        %v1755 = vshrl.u32 %v1754, 7
        %v1756 = vsub.s32 0, %v1755
        %v1757 = vrot.slane %v1718, %v1756
        %v1759 = vadd.f32 %v1751, %v1757
        %v1760 = vadd.f32 %v1752, %v1757
        %v1761 = vpack.c.bf16 %v1760, %v1759
        %v1762 = vld [vmem:[%s9] sm:$0xff]
        %v1763 = vld [vmem:[%s9 + $0x8] sm:$0xff]
        %v1764 = vld [vmem:[%s9 + $0x10] sm:$0xff]
        %v1765 = vld [vmem:[%s9 + $0x18] sm:$0xff]
        %v1766 = vld [vmem:[%s9 + $0x20] sm:$0xff]
        %v1767 = vld [vmem:[%s9 + $0x28] sm:$0xff]
        %v1768 = vld [vmem:[%s9 + $0x30] sm:$0xff]
        %v1769 = vld [vmem:[%s9 + $0x38] sm:$0xff]
        %v1770 = vld [vmem:[%s10] sm:$0x3]
        %v1772 = vlaneseq
        %v1773 = vshrl.u32 %v1772, 7
        %v1774 = vsub.s32 0, %v1773
        %v1775 = vrot.slane %v1770, %v1774
        %v1776 = vlaneseq
        %v1777 = vshrl.u32 %v1776, 7
        %v1778 = vsub.s32 1, %v1777
        %v1779 = vrot.slane %v1770, %v1778
        %v1790 = vunpack.c.l.b16 %v1762
        %v1791 = vunpack.c.h.b16 %v1762
        %v1792 = vunpack.c.l.b16 %v1763
        %v1793 = vunpack.c.h.b16 %v1763
        %v1794 = vunpack.c.l.b16 %v1764
        %v1795 = vunpack.c.h.b16 %v1764
        %v1796 = vunpack.c.l.b16 %v1765
        %v1797 = vunpack.c.h.b16 %v1765
        %v1798 = vunpack.c.l.b16 %v1766
        %v1799 = vunpack.c.h.b16 %v1766
        %v1800 = vunpack.c.l.b16 %v1767
        %v1801 = vunpack.c.h.b16 %v1767
        %v1802 = vunpack.c.l.b16 %v1768
        %v1803 = vunpack.c.h.b16 %v1768
        %v1804 = vunpack.c.l.b16 %v1769
        %v1805 = vunpack.c.h.b16 %v1769
        %v1806 = vpack.c.b16 %v1792, %v1790
        %v1807 = vpack.c.b16 %v1793, %v1791
        %v1808 = vpack.c.b16 %v1796, %v1794
        %v1809 = vpack.c.b16 %v1797, %v1795
        %v1810 = vpack.c.b16 %v1800, %v1798
        %v1811 = vpack.c.b16 %v1801, %v1799
        %v1812 = vpack.c.b16 %v1804, %v1802
        %v1813 = vpack.c.b16 %v1805, %v1803
        %v1823 = vsel %vm444, %v1761, 0
        %1825 = vmatprep.subr.bf16.mxu0 0
        %1826 = vmatpush1.bf16.msra.mxu0 0
        %1827 = vmatprep.subr.bf16.mxu0 0
        %1828 = vmatpush1.bf16.msra.mxu0 0
        %1829 = vmatprep.subr.bf16.mxu0 0
        %1830 = vmatpush1.bf16.msra.mxu0 0
        %1831 = vmatprep.subr.bf16.mxu0 0
        %1832 = vmatpush1.bf16.msra.mxu0 0
        %1833 = vmatprep.subr.bf16.mxu0 %v1813
        %1834 = vmatpush1.bf16.msra.mxu0 %v1812
        %1835 = vmatprep.subr.bf16.mxu0 %v1811
        %1836 = vmatpush1.bf16.msra.mxu0 %v1810
        %1837 = vmatprep.subr.bf16.mxu0 %v1809
        %1838 = vmatpush1.bf16.msra.mxu0 %v1808
        %1839 = vmatprep.subr.bf16.mxu0 %v1807
        %1840 = vmatpush1.bf16.msra.mxu0 %v1806
        %1841 = vmatprep.subr.bf16.mxu0 0
        %1842 = vmatpush2.bf16.msra.mxu0 0
        %1843 = vmatprep.subr.bf16.mxu0 0
        %1844 = vmatpush2.bf16.msra.mxu0 0
        %1845 = vmatprep.subr.bf16.mxu0 0
        %1846 = vmatpush2.bf16.msra.mxu0 0
        %1847 = vmatprep.subr.bf16.mxu0 0
        %1848 = vmatpush2.bf16.msra.mxu0 0
        %1849 = vmatprep.subr.bf16.mxu0 0
        %1850 = vmatpush2.bf16.msra.mxu0 0
        %1851 = vmatprep.subr.bf16.mxu0 0
        %1852 = vmatpush2.bf16.msra.mxu0 0
        %1853 = vmatprep.subr.bf16.mxu0 0
        %1854 = vmatpush2.bf16.msra.mxu0 0
        %1855 = vmatprep.subr.bf16.mxu0 0
        %1856 = vmatpush2.bf16.msra.mxu0 0
        %1857 = vmatprep.mubr.bf16.mxu0 0
        %1858 = vmatmul.mubr.bf16.gmra.mxu0 %v1823
        %v1859 = vpop.f32.mrf.mxu0
        %v1860 = vadd.f32 %v1775, %v1859
        %v1861 = vpop.f32.mrf.mxu0
        %v1862 = vadd.f32 %v1779, %v1861
        %v1863 = vpop.f32.mrf.mxu0
        %v1864 = vadd.f32 %v1775, %v1863
        %v1865 = vpop.f32.mrf.mxu0
        %v1866 = vadd.f32 %v1779, %v1865
        %1867 = vdwg.mxu0
        %v1868 = vmul.f32 %v1860, 0.5
        %v1869 = vmul.f32 %v1862, 0.5
        %v1870 = vmul.f32 %v1864, 0.5
        %v1871 = vmul.f32 %v1866, 0.5
        %v1872 = vmul.f32 %v1860, 0.044715
        %v1873 = vmul.f32 %v1862, 0.044715
        %v1874 = vmul.f32 %v1864, 0.044715
        %v1875 = vmul.f32 %v1866, 0.044715
        %v1876 = vmul.f32 %v1872, %v1860
        %v1877 = vmul.f32 %v1873, %v1862
        %v1878 = vmul.f32 %v1874, %v1864
        %v1879 = vmul.f32 %v1875, %v1866
        %v1880 = vmul.f32 %v1876, %v1860
        %v1881 = vmul.f32 %v1877, %v1862
        %v1882 = vmul.f32 %v1878, %v1864
        %v1883 = vmul.f32 %v1879, %v1866
        %v1884 = vadd.f32 %v1860, %v1880
        %v1885 = vadd.f32 %v1862, %v1881
        %v1886 = vadd.f32 %v1864, %v1882
        %v1887 = vadd.f32 %v1866, %v1883
        %v1888 = vmul.f32 %v1884, 0.7978846
        %v1889 = vmul.f32 %v1885, 0.7978846
        %v1890 = vmul.f32 %v1886, 0.7978846
        %v1891 = vmul.f32 %v1887, 0.7978846
        %v1892 = vtanh.pop %v1888
        %v1893 = vtanh.pop %v1889
        %v1894 = vtanh.pop %v1890
        %v1895 = vtanh.pop %v1891
        %v1896 = vadd.f32 %v1892, 1.0
        %v1897 = vadd.f32 %v1893, 1.0
        %v1898 = vadd.f32 %v1894, 1.0
        %v1899 = vadd.f32 %v1895, 1.0
        %v1900 = vmul.f32 %v1868, %v1896
        %v1901 = vmul.f32 %v1869, %v1897
        %v1902 = vmul.f32 %v1870, %v1898
        %v1903 = vmul.f32 %v1871, %v1899
        %v1904 = vpack.c.bf16 %v1902, %v1900
        %v1905 = vpack.c.bf16 %v1903, %v1901
        %v1906 = vld [vmem:[%s11] sm:$0xf]
        %v1907 = vld [vmem:[%s11 + $0x4] sm:$0xf]
        %v1908 = vld [vmem:[%s11 + $0x8] sm:$0xf]
        %v1909 = vld [vmem:[%s11 + $0xc] sm:$0xf]
        %v1910 = vld [vmem:[%s11 + $0x10] sm:$0xf]
        %v1911 = vld [vmem:[%s11 + $0x14] sm:$0xf]
        %v1912 = vld [vmem:[%s11 + $0x18] sm:$0xf]
        %v1913 = vld [vmem:[%s11 + $0x1c] sm:$0xf]
        %v1914 = vld [vmem:[%s11 + $0x20] sm:$0xf]
        %v1915 = vld [vmem:[%s11 + $0x24] sm:$0xf]
        %v1916 = vld [vmem:[%s11 + $0x28] sm:$0xf]
        %v1917 = vld [vmem:[%s11 + $0x2c] sm:$0xf]
        %v1918 = vld [vmem:[%s11 + $0x30] sm:$0xf]
        %v1919 = vld [vmem:[%s11 + $0x34] sm:$0xf]
        %v1920 = vld [vmem:[%s11 + $0x38] sm:$0xf]
        %v1921 = vld [vmem:[%s11 + $0x3c] sm:$0xf]
        %v1922 = vld [vmem:[%s11 + $0x40] sm:$0xf]
        %v1923 = vld [vmem:[%s11 + $0x44] sm:$0xf]
        %v1924 = vld [vmem:[%s11 + $0x48] sm:$0xf]
        %v1925 = vld [vmem:[%s11 + $0x4c] sm:$0xf]
        %v1926 = vld [vmem:[%s11 + $0x50] sm:$0xf]
        %v1927 = vld [vmem:[%s11 + $0x54] sm:$0xf]
        %v1928 = vld [vmem:[%s11 + $0x58] sm:$0xf]
        %v1929 = vld [vmem:[%s11 + $0x5c] sm:$0xf]
        %v1930 = vld [vmem:[%s11 + $0x60] sm:$0xf]
        %v1931 = vld [vmem:[%s11 + $0x64] sm:$0xf]
        %v1932 = vld [vmem:[%s11 + $0x68] sm:$0xf]
        %v1933 = vld [vmem:[%s11 + $0x6c] sm:$0xf]
        %v1934 = vld [vmem:[%s11 + $0x70] sm:$0xf]
        %v1935 = vld [vmem:[%s11 + $0x74] sm:$0xf]
        %v1936 = vld [vmem:[%s11 + $0x78] sm:$0xf]
        %v1937 = vld [vmem:[%s11 + $0x7c] sm:$0xf]
        %v1938 = vld [vmem:[%s12] sm:$0x1]
        %v1940 = vlaneseq
        %v1941 = vshrl.u32 %v1940, 7
        %v1942 = vsub.s32 0, %v1941
        %v1943 = vrot.slane %v1938, %v1942
        %v1977 = vunpack.c.l.b16 %v1906
        %v1978 = vunpack.c.l.b16 %v1907
        %v1979 = vunpack.c.l.b16 %v1908
        %v1980 = vunpack.c.l.b16 %v1909
        %v1981 = vunpack.c.l.b16 %v1910
        %v1982 = vunpack.c.l.b16 %v1911
        %v1983 = vunpack.c.l.b16 %v1912
        %v1984 = vunpack.c.l.b16 %v1913
        %v1985 = vunpack.c.l.b16 %v1914
        %v1986 = vunpack.c.l.b16 %v1915
        %v1987 = vunpack.c.l.b16 %v1916
        %v1988 = vunpack.c.l.b16 %v1917
        %v1989 = vunpack.c.l.b16 %v1918
        %v1990 = vunpack.c.l.b16 %v1919
        %v1991 = vunpack.c.l.b16 %v1920
        %v1992 = vunpack.c.l.b16 %v1921
        %v1993 = vunpack.c.l.b16 %v1922
        %v1994 = vunpack.c.l.b16 %v1923
        %v1995 = vunpack.c.l.b16 %v1924
        %v1996 = vunpack.c.l.b16 %v1925
        %v1997 = vunpack.c.l.b16 %v1926
        %v1998 = vunpack.c.l.b16 %v1927
        %v1999 = vunpack.c.l.b16 %v1928
        %v2000 = vunpack.c.l.b16 %v1929
        %v2001 = vunpack.c.l.b16 %v1930
        %v2002 = vunpack.c.l.b16 %v1931
        %v2003 = vunpack.c.l.b16 %v1932
        %v2004 = vunpack.c.l.b16 %v1933
        %v2005 = vunpack.c.l.b16 %v1934
        %v2006 = vunpack.c.l.b16 %v1935
        %v2007 = vunpack.c.l.b16 %v1936
        %v2008 = vunpack.c.l.b16 %v1937
        %v2009 = vpack.c.b16 %v1978, %v1977
        %v2010 = vpack.c.b16 %v1980, %v1979
        %v2011 = vpack.c.b16 %v1982, %v1981
        %v2012 = vpack.c.b16 %v1984, %v1983
        %v2013 = vpack.c.b16 %v1986, %v1985
        %v2014 = vpack.c.b16 %v1988, %v1987
        %v2015 = vpack.c.b16 %v1990, %v1989
        %v2016 = vpack.c.b16 %v1992, %v1991
        %v2017 = vpack.c.b16 %v1994, %v1993
        %v2018 = vpack.c.b16 %v1996, %v1995
        %v2019 = vpack.c.b16 %v1998, %v1997
        %v2020 = vpack.c.b16 %v2000, %v1999
        %v2021 = vpack.c.b16 %v2002, %v2001
        %v2022 = vpack.c.b16 %v2004, %v2003
        %v2023 = vpack.c.b16 %v2006, %v2005
        %v2024 = vpack.c.b16 %v2008, %v2007
        %2041 = vmatprep.subr.bf16.mxu0 0
        %2042 = vmatpush1.bf16.msra.mxu0 %v2016
        %2043 = vmatprep.subr.bf16.mxu0 0
        %2044 = vmatpush1.bf16.msra.mxu0 %v2015
        %2045 = vmatprep.subr.bf16.mxu0 0
        %2046 = vmatpush1.bf16.msra.mxu0 %v2014
        %2047 = vmatprep.subr.bf16.mxu0 0
        %2048 = vmatpush1.bf16.msra.mxu0 %v2013
        %2049 = vmatprep.subr.bf16.mxu0 0
        %2050 = vmatpush1.bf16.msra.mxu0 %v2012
        %2051 = vmatprep.subr.bf16.mxu0 0
        %2052 = vmatpush1.bf16.msra.mxu0 %v2011
        %2053 = vmatprep.subr.bf16.mxu0 0
        %2054 = vmatpush1.bf16.msra.mxu0 %v2010
        %2055 = vmatprep.subr.bf16.mxu0 0
        %2056 = vmatpush1.bf16.msra.mxu0 %v2009
        %2057 = vmatprep.subr.bf16.mxu0 0
        %2058 = vmatpush2.bf16.msra.mxu0 %v2024
        %2059 = vmatprep.subr.bf16.mxu0 0
        %2060 = vmatpush2.bf16.msra.mxu0 %v2023
        %2061 = vmatprep.subr.bf16.mxu0 0
        %2062 = vmatpush2.bf16.msra.mxu0 %v2022
        %2063 = vmatprep.subr.bf16.mxu0 0
        %2064 = vmatpush2.bf16.msra.mxu0 %v2021
        %2065 = vmatprep.subr.bf16.mxu0 0
        %2066 = vmatpush2.bf16.msra.mxu0 %v2020
        %2067 = vmatprep.subr.bf16.mxu0 0
        %2068 = vmatpush2.bf16.msra.mxu0 %v2019
        %2069 = vmatprep.subr.bf16.mxu0 0
        %2070 = vmatpush2.bf16.msra.mxu0 %v2018
        %2071 = vmatprep.subr.bf16.mxu0 0
        %2072 = vmatpush2.bf16.msra.mxu0 %v2017
        %2073 = vmatprep.mubr.bf16.mxu0 %v1905
        %2074 = vmatmul.mubr.bf16.gmra.mxu0 %v1904
        %v2075 = vpop.f32.mrf.mxu0
        %v2076 = vadd.f32 %v1943, %v2075
        %v2077 = vpop.f32.mrf.mxu0
        %v2078 = vpop.f32.mrf.mxu0
        %v2079 = vadd.f32 %v1943, %v2078
        %v2080 = vpop.f32.mrf.mxu0
        %2081 = vdwg.mxu0
        %v2082 = vadd.f32 %v1715, %v2076
        %v2083 = vadd.f32 %v1716, %v2079
        %2084 = vst.msk [vmem:[%s433] sm:$0xff] %vm444, %v2082
        %2085 = vst.msk [vmem:[%s433 + $0x8] sm:$0xff] %vm444, %v2083
        %s2086 = sand.u32 %s313, 1
        %s2087 = scalar_lea.sflag [#allocation3], %s2086
        %s2088 = sand.u32 %s313, 1
        %s2089 = smul.addr %s2088, 16
        %s2090 = scalar_lea.vmem [#allocation2], %s2089
        // Predicated region
        $region73: #{encoder_layer_fwd.1} parent=71 // pred_check
          %p2091 = pneg %p323
        $region74: #{encoder_layer_fwd.1} parent=71 // pred_check_branch
          %2093 = sbr.rel (%p2091) target = $region76
        $region75: #{encoder_layer_fwd.1} parent=71 // pred_region
          %s2095 = ssub.s32 256, 256
          %2096 = vsyncadd %s2087, %s2095
          %s2097 = smul.addr %s27, 2
          %s2098 = smul.addr %s2097, 128
          %s2099 = scalar_lea.hbm %s13, %s2098
          %s2100 = sshll.u32 %s2090, 4
          %s2101 = int_to_ptr.vmem [resolvable:$true] %s2100
          %2106 = dma.vmem_to_hbm [thread:$0]  %s2101, 256, %s2099, %s2087, 128, 128, 8
        $region76: #{encoder_layer_fwd.1} parent=71 // pred_fallthru
          _
      $region72: #{encoder_layer_fwd.1} parent=5 // pred_fallthru
        _
      %p2107 = scmp.le.s32.totalorder 2, %s22
      // Predicated region
      $region77: #{encoder_layer_fwd.1} parent=5 // pred_check
        %p2108 = pneg %p2107
      $region78: #{encoder_layer_fwd.1} parent=5 // pred_check_branch
        %2110 = sbr.rel (%p2108) target = $region80
      $region79: #{encoder_layer_fwd.1} parent=5 // pred_region
        %s2111 = ssub.s32 %s22, 2
        // Predicated region
        $region81: #{encoder_layer_fwd.1} parent=79 // pred_check
          %p2112 = pneg %p329
        $region82: #{encoder_layer_fwd.1} parent=79 // pred_check_branch
          %2114 = sbr.rel (%p2112) target = $region84
        $region83: #{encoder_layer_fwd.1} parent=79 // pred_region
          %s2115 = sand.u32 %s314, 1
          %s2116 = scalar_lea.sflag [#allocation3], %s2115
          %s2117 = sand.u32 %s314, 1
          %s2118 = smul.addr %s2117, 16
          %s2119 = scalar_lea.vmem [#allocation2], %s2118
          %2120 = dma.done %s2116, 256
        $region84: #{encoder_layer_fwd.1} parent=79 // pred_fallthru
          _
      $region80: #{encoder_layer_fwd.1} parent=5 // pred_fallthru
        _
    $region6: #{encoder_layer_fwd.1} parent=1 // loop_footer
      %s26 = sadd.s32 1, %s22
    $region7: #{encoder_layer_fwd.1} parent=1 // loop_footer_branch
      %21 = sbr.rel target = $region3
    $region8: #{encoder_layer_fwd.1} parent=1 // loop_exit
      _
    %2121 = vsyncpa [#allocation3], 1
    %s2122 = scalar_lea.sflag [#allocation3], 1
    %2123 = vsyncpa %s2122, 1

</llo_original>
